<compile_context>
chip_gen: v7x
topology: tpu7x:2x2x1
jax: 0.10.0
libtpu: 0.0.40
codegen_flags: <defaults>
</compile_context>

<pallas_src>
import functools

import jax
import jax.numpy as jnp
from jax.experimental import pallas as pl
from jax.experimental.pallas import tpu as pltpu


def _round_up(x, m):
    return (x + m - 1) // m * m


# ---------------------------------------------------------------------------
# Pallas kernel: fused EmbeddingLayer gather + TimeSensPerceptron forward
# ---------------------------------------------------------------------------
def _perceptron_kernel(idx_ref, m_ref, b1_ref, w2_ref, b2_ref,
                       wp_ref, bp_ref, out_ref, *,
                       n_fields, vp, n_day, n_neighbors, np_pad):
    tb = idx_ref.shape[0]

    ids = idx_ref[...]                                   # (TB, n_fields+2) i32
    # Single shared iota, reused for the one-hot compares, the neighbor-weight
    # masks and the output-column select.
    cols_vp = jax.lax.broadcasted_iota(jnp.int32, (tb, vp), 1)
    cols = (cols_vp if vp == np_pad
            else jax.lax.broadcasted_iota(jnp.int32, (tb, np_pad), 1))

    # --- fused embedding gather + Linear(D, 64): per-field 128-lane one-hot
    #     blocks concatenated into the (TB, n_fields*VP) MXU LHS -------------
    blocks = [(cols_vp == ids[:, f:f + 1]).astype(jnp.bfloat16)
              for f in range(n_fields)]
    onehot = jnp.concatenate(blocks, axis=1)             # (TB, n_fields*VP)

    h1 = jnp.dot(onehot, m_ref[...],
                 preferred_element_type=jnp.float32) + b1_ref[...]
    h1 = jnp.maximum(h1, 0.0)
    # Dropout(0.3) == identity in eval mode.

    # --- Linear(64, n_day) -> ReLU (padded to 128 lanes) -------------------
    h = jnp.dot(h1.astype(jnp.bfloat16), w2_ref[...],
                preferred_element_type=jnp.float32) + b2_ref[...]
    h = jnp.maximum(h, 0.0)                              # hidden_orig

    # --- proj_second + residual: Wp already holds (wp + I), so the residual
    #     is folded into the matmul (padded lanes of h are zero) -------------
    h2 = jnp.dot(h.astype(jnp.bfloat16), wp_ref[...],
                 preferred_element_type=jnp.float32) + bp_ref[...]

    # --- gather hidden[arange(B), diff] and clamped +/- i neighbors via
    #     one-hot masks (matches the reference's double-counting at clamps) --
    diff = ids[:, n_fields:n_fields + 1]                 # (TB, 1) i32
    weight = (cols == diff).astype(jnp.float32)
    for i in range(1, n_neighbors + 1):
        left = jnp.maximum(diff - i, 0)
        right = jnp.minimum(diff + i, n_day - 1)
        weight = weight + (cols == left).astype(jnp.float32)
        weight = weight + (cols == right).astype(jnp.float32)

    out = jnp.sum(h2 * weight, axis=1, keepdims=True) * \
        (1.0 / float(2 * n_neighbors + 1))
    yt = jax.nn.sigmoid(out)                             # (TB, 1)

    # Lane-dense bf16 output slab: yt_mat in cols [0, n_day), yt in col n_day.
    out_ref[...] = jnp.where(cols == n_day, yt, h2).astype(out_ref.dtype)


def time_sens_perceptron(x_item, diff, embed_tables, params, n_day,
                         n_neighbors=1, batch_tile=2048):
    """x_item: (B, n_fields) int32 ids, diff: (B,) int32.

    Returns (yt (B, 1) f32, yt_mat (B, n_day) f32)."""
    w1, b1, w2, b2, wp, bp = params
    B, n_fields = x_item.shape
    d_emb = embed_tables[0].shape[1]
    H = w1.shape[1]                                      # 64

    HP = 128                                             # padded hidden dim
    NP = _round_up(n_day + 1, 128)                       # padded n_day + yt slot
    VP = max(128, _round_up(max(t.shape[0] for t in embed_tables), 128))
    # TODO(synk): if per-field vocab sizes grow to many thousands, switch from
    # the VMEM-resident one-hot matmul to a scalar-prefetch row gather of M.

    # Fused (table_f @ W1_f) blocks, zero-padded and stacked -> (n_fields*VP, HP)
    M = jnp.zeros((n_fields * VP, HP), jnp.float32)
    for f, tbl in enumerate(embed_tables):
        blk = tbl.astype(jnp.float32) @ w1[f * d_emb:(f + 1) * d_emb, :]
        M = M.at[f * VP:f * VP + tbl.shape[0], :H].set(blk)
    M = M.astype(jnp.bfloat16)

    b1p = jnp.zeros((1, HP), jnp.float32).at[0, :H].set(b1)
    w2p = jnp.zeros((HP, NP), jnp.float32).at[:H, :n_day].set(w2).astype(jnp.bfloat16)
    b2p = jnp.zeros((1, NP), jnp.float32).at[0, :n_day].set(b2)
    # Residual folded into the projection weight: Wp <- wp + I.
    wp_res = wp + jnp.eye(n_day, dtype=jnp.float32)
    wpp = jnp.zeros((NP, NP), jnp.float32).at[:n_day, :n_day].set(wp_res)
    wpp = wpp.astype(jnp.bfloat16)
    bpp = jnp.zeros((1, NP), jnp.float32).at[0, :n_day].set(bp)

    # Merge ids + diff (+1 pad col) into a single (B, 8) int32 input so one
    # BlockSpec / one DMA descriptor covers all scalar per-row data.
    idx = jnp.concatenate(
        [x_item.astype(jnp.int32),
         diff.reshape(B, 1).astype(jnp.int32),
         jnp.zeros((B, 1), jnp.int32)], axis=1)          # (B, n_fields + 2)
    n_idx = idx.shape[1]

    # >= 2 grid steps whenever the batch allows (keeps both v7x TCs busy),
    # while still using large tiles to amortize per-step overhead.
    TB = min(batch_tile, _round_up(max(8, (B + 1) // 2), 8))
    B_pad = _round_up(B, TB)
    if B_pad != B:
        idx = jnp.pad(idx, ((0, B_pad - B), (0, 0)))

    kernel = functools.partial(_perceptron_kernel, n_fields=n_fields, vp=VP,
                               n_day=n_day, n_neighbors=n_neighbors, np_pad=NP)
    slab = pl.pallas_call(
        kernel,
        out_shape=jax.ShapeDtypeStruct((B_pad, NP), jnp.bfloat16),
        grid=(B_pad // TB,),
        in_specs=[
            pl.BlockSpec((TB, n_idx), lambda i: (i, 0)),          # ids+diff
            pl.BlockSpec((n_fields * VP, HP), lambda i: (0, 0)),  # M (resident)
            pl.BlockSpec((1, HP), lambda i: (0, 0)),              # b1
            pl.BlockSpec((HP, NP), lambda i: (0, 0)),             # W2
            pl.BlockSpec((1, NP), lambda i: (0, 0)),              # b2
            pl.BlockSpec((NP, NP), lambda i: (0, 0)),             # Wp (+ I)
            pl.BlockSpec((1, NP), lambda i: (0, 0)),              # bp
        ],
        out_specs=pl.BlockSpec((TB, NP), lambda i: (i, 0)),
        compiler_params=pltpu.CompilerParams(
            dimension_semantics=("parallel",),
            vmem_limit_bytes=32 * 1024 * 1024),
    )(idx, M, b1p, w2p, b2p, wpp, bpp)

    slab = slab.astype(jnp.float32)
    yt = slab[:B, n_day:n_day + 1]
    yt_mat = slab[:B, :n_day]
    return yt, yt_mat


# ---------------------------------------------------------------------------
# LDRI wrapper
# ---------------------------------------------------------------------------
def ldri_forward(x, diff, embed_tables, pcp_params, n_day, n_neighbors,
                 batch_tile=2048):
    B = x.shape[0]

    # TODO(synk): NFM backbone class is not provided in the reference source;
    # ym is returned as a zeros placeholder rather than faking its semantics.
    ym = jnp.zeros((B, 1), jnp.float32)

    # x_item = x[:, [1, 2, 9, 10, 11, 12]]; all 6 columns are sparse id fields.
    item_cols = jnp.array([1, 2, 9, 10, 11, 12], dtype=jnp.int32)
    x_item = x[:, item_cols].astype(jnp.int32)           # (B, 6)

    yt, yt_mat = time_sens_perceptron(x_item, diff, embed_tables, pcp_params,
                                      n_day, n_neighbors, batch_tile)
    return ym, yt, yt_mat


# ---------------------------------------------------------------------------
# Pure-JAX f32 reference (for correctness check)
# ---------------------------------------------------------------------------
def reference_perceptron(x_item, diff, embed_tables, params, n_day, n_neighbors):
    w1, b1, w2, b2, wp, bp = params
    embeds = [tbl[x_item[:, f]] for f, tbl in enumerate(embed_tables)]
    pcp_x = jnp.concatenate(embeds, axis=1).astype(jnp.float32)
    h1 = jnp.maximum(pcp_x @ w1 + b1, 0.0)
    h = jnp.maximum(h1 @ w2 + b2, 0.0)
    h2 = h @ wp + bp + h
    B = x_item.shape[0]
    rows = jnp.arange(B)
    out = h2[rows, diff]
    for i in range(1, n_neighbors + 1):
        left = jnp.maximum(diff - i, 0)
        right = jnp.minimum(diff + i, n_day - 1)
        out = out + h2[rows, left]
        out = out + h2[rows, right]
    out = out / (2 * n_neighbors + 1)
    return jax.nn.sigmoid(out).reshape(-1, 1), h2


# ---------------------------------------------------------------------------
# Deterministic parameter construction + demo
# ---------------------------------------------------------------------------
def make_params(key, embed_dim, n_day, vocab_sizes, embed_dim_sparse=16):
    keys = jax.random.split(key, 6 + len(vocab_sizes))
    tables = tuple(
        0.01 * jax.random.normal(keys[i], (v, embed_dim_sparse), jnp.float32)
        for i, v in enumerate(vocab_sizes)
    )
    k = len(vocab_sizes)
    w1 = 0.05 * jax.random.normal(keys[k + 0], (embed_dim, 64), jnp.float32)
    b1 = 0.05 * jax.random.normal(keys[k + 1], (64,), jnp.float32)
    w2 = 0.05 * jax.random.normal(keys[k + 2], (64, n_day), jnp.float32)
    b2 = 0.05 * jax.random.normal(keys[k + 3], (n_day,), jnp.float32)
    wp = 0.05 * jax.random.normal(keys[k + 4], (n_day, n_day), jnp.float32)
    bp = 0.05 * jax.random.normal(keys[k + 5], (n_day,), jnp.float32)
    return tables, (w1, b1, w2, b2, wp, bp)


if __name__ == "__main__":
    key = jax.random.PRNGKey(0)

    B = 64
    n_day = 7
    n_neighbors = 1
    embed_dim_sparse = 16
    vocab_sizes = [10, 20, 30, 15, 8, 12]                # 6 sparse item fields
    embed_dim_cat = embed_dim_sparse * len(vocab_sizes)  # 96
    n_features = 13                                      # covers column 12

    k_x, k_diff, k_p = jax.random.split(key, 3)
    # Integer-valued ids stored as float (PyTorch-style), within every vocab.
    x = jax.random.randint(k_x, (B, n_features), 0, 8).astype(jnp.float32)
    diff = jax.random.randint(k_diff, (B,), 0, n_day).astype(jnp.int32)

    embed_tables, pcp_params = make_params(k_p, embed_dim_cat, n_day,
                                           vocab_sizes, embed_dim_sparse)

    # batch_tile=32 -> 2 grid steps, exercising the pipelined/tiled path.
    ym, yt, yt_mat = ldri_forward(x, diff, embed_tables, pcp_params,
                                  n_day, n_neighbors, batch_tile=32)
    jax.block_until_ready((ym, yt, yt_mat))

    assert ym.shape == (B, 1)
    assert yt.shape == (B, 1)
    assert yt_mat.shape == (B, n_day)
    assert bool(jnp.all((yt > 0.0) & (yt < 1.0)))

    # Compare against the f32 pure-JAX reference (bf16 weights/out -> loose tol).
    item_cols = jnp.array([1, 2, 9, 10, 11, 12], dtype=jnp.int32)
    x_item = x[:, item_cols].astype(jnp.int32)
    yt_ref, yt_mat_ref = reference_perceptron(x_item, diff, embed_tables,
                                              pcp_params, n_day, n_neighbors)
    assert float(jnp.max(jnp.abs(yt - yt_ref))) < 2e-2
    assert float(jnp.max(jnp.abs(yt_mat - yt_mat_ref))) < 2e-2

    print("KERNEL_OK")
</pallas_src>

<mosaic_0001>
module attributes {stable_mosaic.version = 11 : i64} {
  func.func @_perceptron_kernel(%arg0: i32, %arg1: memref<32x8xi32, #tpu.memory_space<vmem>>, %arg2: memref<768x128xbf16, #tpu.memory_space<vmem>>, %arg3: memref<1x128xf32, #tpu.memory_space<vmem>>, %arg4: memref<128x128xbf16, #tpu.memory_space<vmem>>, %arg5: memref<1x128xf32, #tpu.memory_space<vmem>>, %arg6: memref<128x128xbf16, #tpu.memory_space<vmem>>, %arg7: memref<1x128xf32, #tpu.memory_space<vmem>>, %arg8: memref<32x128xbf16, #tpu.memory_space<vmem>>) attributes {dimension_semantics = [#tpu.dimension_semantics<parallel>], iteration_bounds = array<i64: 2>, scalar_prefetch = 0 : i64, scratch_operands = 0 : i64, tpu.core_type = #tpu.core_type<tc>, window_params = [{transform_indices = @transform_0, window_bounds = array<i64: 32, 8>}, {pipeline_mode = #tpu.pipeline_mode<synchronous>, transform_indices = @transform_1, window_bounds = array<i64: 768, 128>}, {pipeline_mode = #tpu.pipeline_mode<synchronous>, transform_indices = @transform_2, window_bounds = array<i64: 1, 128>}, {pipeline_mode = #tpu.pipeline_mode<synchronous>, transform_indices = @transform_3, window_bounds = array<i64: 128, 128>}, {pipeline_mode = #tpu.pipeline_mode<synchronous>, transform_indices = @transform_4, window_bounds = array<i64: 1, 128>}, {pipeline_mode = #tpu.pipeline_mode<synchronous>, transform_indices = @transform_5, window_bounds = array<i64: 128, 128>}, {pipeline_mode = #tpu.pipeline_mode<synchronous>, transform_indices = @transform_6, window_bounds = array<i64: 1, 128>}, {transform_indices = @transform_7, window_bounds = array<i64: 32, 128>}]} {
    %c0 = arith.constant 0 : index
    %c0_0 = arith.constant 0 : index
    %0 = vector.load %arg1[%c0, %c0_0] : memref<32x8xi32, #tpu.memory_space<vmem>>, vector<32x8xi32>
    %1 = tpu.iota {dimensions = array<i32: 1>} : vector<32x128xi32>
    %2 = vector.extract_strided_slice %0 {offsets = [0, 0], sizes = [32, 1], strides = [1, 1]} : vector<32x8xi32> to vector<32x1xi32>
    %3 = vector.broadcast %2 : vector<32x1xi32> to vector<32x128xi32>
    %4 = arith.cmpi eq, %1, %3 : vector<32x128xi32>
    %5 = arith.extui %4 : vector<32x128xi1> to vector<32x128xi32>
    %6 = arith.sitofp %5 : vector<32x128xi32> to vector<32x128xf32>
    %7 = arith.truncf %6 : vector<32x128xf32> to vector<32x128xbf16>
    %8 = vector.extract_strided_slice %0 {offsets = [0, 1], sizes = [32, 1], strides = [1, 1]} : vector<32x8xi32> to vector<32x1xi32>
    %9 = vector.broadcast %8 : vector<32x1xi32> to vector<32x128xi32>
    %10 = arith.cmpi eq, %1, %9 : vector<32x128xi32>
    %11 = arith.extui %10 : vector<32x128xi1> to vector<32x128xi32>
    %12 = arith.sitofp %11 : vector<32x128xi32> to vector<32x128xf32>
    %13 = arith.truncf %12 : vector<32x128xf32> to vector<32x128xbf16>
    %14 = vector.extract_strided_slice %0 {offsets = [0, 2], sizes = [32, 1], strides = [1, 1]} : vector<32x8xi32> to vector<32x1xi32>
    %15 = vector.broadcast %14 : vector<32x1xi32> to vector<32x128xi32>
    %16 = arith.cmpi eq, %1, %15 : vector<32x128xi32>
    %17 = arith.extui %16 : vector<32x128xi1> to vector<32x128xi32>
    %18 = arith.sitofp %17 : vector<32x128xi32> to vector<32x128xf32>
    %19 = arith.truncf %18 : vector<32x128xf32> to vector<32x128xbf16>
    %20 = vector.extract_strided_slice %0 {offsets = [0, 3], sizes = [32, 1], strides = [1, 1]} : vector<32x8xi32> to vector<32x1xi32>
    %21 = vector.broadcast %20 : vector<32x1xi32> to vector<32x128xi32>
    %22 = arith.cmpi eq, %1, %21 : vector<32x128xi32>
    %23 = arith.extui %22 : vector<32x128xi1> to vector<32x128xi32>
    %24 = arith.sitofp %23 : vector<32x128xi32> to vector<32x128xf32>
    %25 = arith.truncf %24 : vector<32x128xf32> to vector<32x128xbf16>
    %26 = vector.extract_strided_slice %0 {offsets = [0, 4], sizes = [32, 1], strides = [1, 1]} : vector<32x8xi32> to vector<32x1xi32>
    %27 = vector.broadcast %26 : vector<32x1xi32> to vector<32x128xi32>
    %28 = arith.cmpi eq, %1, %27 : vector<32x128xi32>
    %29 = arith.extui %28 : vector<32x128xi1> to vector<32x128xi32>
    %30 = arith.sitofp %29 : vector<32x128xi32> to vector<32x128xf32>
    %31 = arith.truncf %30 : vector<32x128xf32> to vector<32x128xbf16>
    %32 = vector.extract_strided_slice %0 {offsets = [0, 5], sizes = [32, 1], strides = [1, 1]} : vector<32x8xi32> to vector<32x1xi32>
    %33 = vector.broadcast %32 : vector<32x1xi32> to vector<32x128xi32>
    %34 = arith.cmpi eq, %1, %33 : vector<32x128xi32>
    %35 = arith.extui %34 : vector<32x128xi1> to vector<32x128xi32>
    %36 = arith.sitofp %35 : vector<32x128xi32> to vector<32x128xf32>
    %37 = arith.truncf %36 : vector<32x128xf32> to vector<32x128xbf16>
    %38 = tpu.concatenate %7, %13, %19, %25, %31, %37 in 1 : vector<32x128xbf16>, vector<32x128xbf16>, vector<32x128xbf16>, vector<32x128xbf16>, vector<32x128xbf16>, vector<32x128xbf16> -> vector<32x768xbf16>
    %c0_1 = arith.constant 0 : index
    %c0_2 = arith.constant 0 : index
    %39 = vector.load %arg2[%c0_1, %c0_2] : memref<768x128xbf16, #tpu.memory_space<vmem>>, vector<768x128xbf16>
    %cst = arith.constant dense<0.000000e+00> : vector<32x128xf32>
    %40 = tpu.matmul %38, %39, %cst {dimension_numbers = #tpu.dot_dimension_numbers<[1], [0], [0], [1], [0, 0, 1, 1], [], []>} : vector<32x768xbf16>, vector<768x128xbf16>, vector<32x128xf32> -> vector<32x128xf32>
    %c0_3 = arith.constant 0 : index
    %c0_4 = arith.constant 0 : index
    %41 = vector.load %arg3[%c0_3, %c0_4] : memref<1x128xf32, #tpu.memory_space<vmem>>, vector<1x128xf32>
    %42 = vector.broadcast %41 : vector<1x128xf32> to vector<32x128xf32>
    %43 = arith.addf %40, %42 : vector<32x128xf32>
    %cst_5 = arith.constant 0.000000e+00 : f32
    %44 = vector.broadcast %cst_5 : f32 to vector<32x128xf32>
    %45 = arith.maximumf %43, %44 : vector<32x128xf32>
    %46 = arith.truncf %45 : vector<32x128xf32> to vector<32x128xbf16>
    %c0_6 = arith.constant 0 : index
    %c0_7 = arith.constant 0 : index
    %47 = vector.load %arg4[%c0_6, %c0_7] : memref<128x128xbf16, #tpu.memory_space<vmem>>, vector<128x128xbf16>
    %cst_8 = arith.constant dense<0.000000e+00> : vector<32x128xf32>
    %48 = tpu.matmul %46, %47, %cst_8 {dimension_numbers = #tpu.dot_dimension_numbers<[1], [0], [0], [1], [0, 0, 1, 1], [], []>} : vector<32x128xbf16>, vector<128x128xbf16>, vector<32x128xf32> -> vector<32x128xf32>
    %c0_9 = arith.constant 0 : index
    %c0_10 = arith.constant 0 : index
    %49 = vector.load %arg5[%c0_9, %c0_10] : memref<1x128xf32, #tpu.memory_space<vmem>>, vector<1x128xf32>
    %50 = vector.broadcast %49 : vector<1x128xf32> to vector<32x128xf32>
    %51 = arith.addf %48, %50 : vector<32x128xf32>
    %cst_11 = arith.constant 0.000000e+00 : f32
    %52 = vector.broadcast %cst_11 : f32 to vector<32x128xf32>
    %53 = arith.maximumf %51, %52 : vector<32x128xf32>
    %54 = arith.truncf %53 : vector<32x128xf32> to vector<32x128xbf16>
    %c0_12 = arith.constant 0 : index
    %c0_13 = arith.constant 0 : index
    %55 = vector.load %arg6[%c0_12, %c0_13] : memref<128x128xbf16, #tpu.memory_space<vmem>>, vector<128x128xbf16>
    %cst_14 = arith.constant dense<0.000000e+00> : vector<32x128xf32>
    %56 = tpu.matmul %54, %55, %cst_14 {dimension_numbers = #tpu.dot_dimension_numbers<[1], [0], [0], [1], [0, 0, 1, 1], [], []>} : vector<32x128xbf16>, vector<128x128xbf16>, vector<32x128xf32> -> vector<32x128xf32>
    %c0_15 = arith.constant 0 : index
    %c0_16 = arith.constant 0 : index
    %57 = vector.load %arg7[%c0_15, %c0_16] : memref<1x128xf32, #tpu.memory_space<vmem>>, vector<1x128xf32>
    %58 = vector.broadcast %57 : vector<1x128xf32> to vector<32x128xf32>
    %59 = arith.addf %56, %58 : vector<32x128xf32>
    %60 = vector.extract_strided_slice %0 {offsets = [0, 6], sizes = [32, 1], strides = [1, 1]} : vector<32x8xi32> to vector<32x1xi32>
    %61 = vector.broadcast %60 : vector<32x1xi32> to vector<32x128xi32>
    %62 = arith.cmpi eq, %1, %61 : vector<32x128xi32>
    %63 = arith.extui %62 : vector<32x128xi1> to vector<32x128xi32>
    %64 = arith.sitofp %63 : vector<32x128xi32> to vector<32x128xf32>
    %c1_i32 = arith.constant 1 : i32
    %65 = vector.broadcast %c1_i32 : i32 to vector<32x1xi32>
    %66 = arith.subi %60, %65 : vector<32x1xi32>
    %c0_i32 = arith.constant 0 : i32
    %67 = vector.broadcast %c0_i32 : i32 to vector<32x1xi32>
    %68 = arith.maxsi %66, %67 : vector<32x1xi32>
    %c1_i32_17 = arith.constant 1 : i32
    %69 = vector.broadcast %c1_i32_17 : i32 to vector<32x1xi32>
    %70 = arith.addi %60, %69 : vector<32x1xi32>
    %c6_i32 = arith.constant 6 : i32
    %71 = vector.broadcast %c6_i32 : i32 to vector<32x1xi32>
    %72 = arith.minsi %70, %71 : vector<32x1xi32>
    %73 = vector.broadcast %68 : vector<32x1xi32> to vector<32x128xi32>
    %74 = arith.cmpi eq, %1, %73 : vector<32x128xi32>
    %75 = arith.extui %74 : vector<32x128xi1> to vector<32x128xi32>
    %76 = arith.sitofp %75 : vector<32x128xi32> to vector<32x128xf32>
    %77 = arith.addf %64, %76 : vector<32x128xf32>
    %78 = vector.broadcast %72 : vector<32x1xi32> to vector<32x128xi32>
    %79 = arith.cmpi eq, %1, %78 : vector<32x128xi32>
    %80 = arith.extui %79 : vector<32x128xi1> to vector<32x128xi32>
    %81 = arith.sitofp %80 : vector<32x128xi32> to vector<32x128xf32>
    %82 = arith.addf %77, %81 : vector<32x128xf32>
    %83 = arith.mulf %59, %82 : vector<32x128xf32>
    %cst_18 = arith.constant dense<0.000000e+00> : vector<32xf32>
    %84 = vector.multi_reduction <add>, %83, %cst_18 [1] : vector<32x128xf32> to vector<32xf32>
    %85 = vector.shape_cast %84 : vector<32xf32> to vector<32x1xf32>
    %cst_19 = arith.constant 0.333333343 : f32
    %86 = vector.broadcast %cst_19 : f32 to vector<32x1xf32>
    %87 = arith.mulf %85, %86 : vector<32x1xf32>
    %88 = arith.negf %87 : vector<32x1xf32>
    %89 = math.exp %88 : vector<32x1xf32>
    %cst_20 = arith.constant 1.000000e+00 : f32
    %90 = vector.broadcast %cst_20 : f32 to vector<32x1xf32>
    %91 = arith.addf %90, %89 : vector<32x1xf32>
    %92 = arith.divf %90, %91 : vector<32x1xf32>
    %c7_i32 = arith.constant 7 : i32
    %93 = vector.broadcast %c7_i32 : i32 to vector<32x128xi32>
    %94 = arith.cmpi eq, %1, %93 : vector<32x128xi32>
    %95 = vector.shape_cast %92 : vector<32x1xf32> to vector<32x1xf32>
    %96 = vector.broadcast %95 : vector<32x1xf32> to vector<32x128xf32>
    %97 = arith.select %94, %96, %59 : vector<32x128xi1>, vector<32x128xf32>
    %98 = arith.truncf %97 : vector<32x128xf32> to vector<32x128xbf16>
    %c0_21 = arith.constant 0 : index
    %c0_22 = arith.constant 0 : index
    %99 = vector.load %arg8[%c0_21, %c0_22] : memref<32x128xbf16, #tpu.memory_space<vmem>>, vector<32x128xbf16>
    tpu.vector_store %arg8[%c0_21, %c0_22], %98 {strides = array<i32>} : memref<32x128xbf16, #tpu.memory_space<vmem>>, vector<32x128xbf16>,
    return
  }
  func.func @transform_0(%arg0: i32) -> (i32, i32) {
    %c0_i32 = arith.constant 0 : i32
    %c0_i32_0 = arith.constant 0 : i32
    return %arg0, %c0_i32 : i32, i32
  }
  func.func @transform_1(%arg0: i32) -> (i32, i32) {
    %c0_i32 = arith.constant 0 : i32
    %c0_i32_0 = arith.constant 0 : i32
    %c0_i32_1 = arith.constant 0 : i32
    return %c0_i32, %c0_i32_0 : i32, i32
  }
  func.func @transform_2(%arg0: i32) -> (i32, i32) {
    %c0_i32 = arith.constant 0 : i32
    %c0_i32_0 = arith.constant 0 : i32
    %c0_i32_1 = arith.constant 0 : i32
    return %c0_i32, %c0_i32_0 : i32, i32
  }
  func.func @transform_3(%arg0: i32) -> (i32, i32) {
    %c0_i32 = arith.constant 0 : i32
    %c0_i32_0 = arith.constant 0 : i32
    %c0_i32_1 = arith.constant 0 : i32
    return %c0_i32, %c0_i32_0 : i32, i32
  }
  func.func @transform_4(%arg0: i32) -> (i32, i32) {
    %c0_i32 = arith.constant 0 : i32
    %c0_i32_0 = arith.constant 0 : i32
    %c0_i32_1 = arith.constant 0 : i32
    return %c0_i32, %c0_i32_0 : i32, i32
  }
  func.func @transform_5(%arg0: i32) -> (i32, i32) {
    %c0_i32 = arith.constant 0 : i32
    %c0_i32_0 = arith.constant 0 : i32
    %c0_i32_1 = arith.constant 0 : i32
    return %c0_i32, %c0_i32_0 : i32, i32
  }
  func.func @transform_6(%arg0: i32) -> (i32, i32) {
    %c0_i32 = arith.constant 0 : i32
    %c0_i32_0 = arith.constant 0 : i32
    %c0_i32_1 = arith.constant 0 : i32
    return %c0_i32, %c0_i32_0 : i32, i32
  }
  func.func @transform_7(%arg0: i32) -> (i32, i32) {
    %c0_i32 = arith.constant 0 : i32
    %c0_i32_0 = arith.constant 0 : i32
    return %arg0, %c0_i32 : i32, i32
  }
}

</mosaic_0001>

<llo_original>
// kernel: tpu_custom_call.1
$region0: #{tpu_custom_call.1}
  #allocation0 [shape = 'u32[]', space=smem, size = 0x4, offset = 0x4, fixed_abs, tag = 'smem constant byte address 0x4 - core index']
  #allocation1 [shape = 'u32[144,128]{1,0:T(1,128)}', space=vmem, size = 0x12000, scoped, tag = 'internal scratch']
  %s0 = inlined_call_operand.vmem [shape: s32[64,8], index: 0, kind: input, shape index: {}]
  %s1 = inlined_call_operand.hbm [shape: bf16[768,128], index: 1, kind: input, shape index: {}]
  %s2 = inlined_call_operand.vmem [shape: f32[1,128], index: 2, kind: input, shape index: {}]
  %s3 = inlined_call_operand.vmem [shape: bf16[128,128], index: 3, kind: input, shape index: {}]
  %s4 = inlined_call_operand.vmem [shape: f32[1,128], index: 4, kind: input, shape index: {}]
  %s5 = inlined_call_operand.hbm [shape: bf16[128,128], index: 5, kind: input, shape index: {}]
  %s6 = inlined_call_operand.vmem [shape: f32[1,128], index: 6, kind: input, shape index: {}]
  %s7 = inlined_call_operand.hbm [shape: bf16[64,128], index: 7, kind: output, shape index: {}]
  %s8 = sld [smem:[#allocation0]]
  $region69: #{tpu_custom_call.1} parent=0
    _
  %s10 = ssub.s32 1, %s8
  %s11 = scalar_select 0, %s10, %s8
  $region1: #{tpu_custom_call.1} parent=0
    #allocation2 [shape = 'u8[196608]{0}', space=vmem, size = 0x30000, scoped, tag = 'input window, operand 1, single buffered']
    #allocation3 [shape = 's32[2]{0}', space=sflag, size = 0x8, scoped, tag = 'scoped memory for tpu_custom_call.1']
    #allocation4 [shape = 's32[2]{0}', space=sflag, size = 0x8, scoped, tag = 'scoped memory for tpu_custom_call.1']
    #allocation5 [shape = 'u8[32768]{0}', space=vmem, size = 0x8000, scoped, tag = 'input window, operand 5, single buffered']
    #allocation6 [shape = 's32[1]{0}', space=sflag, size = 0x4, scoped, tag = 'scoped memory for tpu_custom_call.1']
    #allocation7 [shape = 'u8[16384]{0}', space=vmem, size = 0x4000, scoped, tag = 'output window, operand 0']
    %12 = vsyncpa [#allocation3], 0
    %13 = vsyncpa [#allocation6], 0
    %14 = vsyncpa [#allocation4], 0
    %s15 = scalar_lea.sflag [#allocation4], 1
    %16 = vsyncpa %s15, 0
    loop: start=0, step=1, limit=4
    $region2: #{tpu_custom_call.1} parent=1 // loop_pre_header
      _
    $region3: #{tpu_custom_call.1} parent=1 // loop_header
      %s18 = sphi 0, %s22
      %p19 = scmp.ge.s32.totalorder %s18, 4
      %s28 = sphi 0, %s30
      %s31 = sphi 0, %s28
      %s32 = sphi 0, %s31
      %s48 = sphi 0, %s32
      %s52 = sphi 0, %s52
      %s54 = sphi 0, %s52
      %s55 = sphi 0, %s54
      %s69 = sphi 0, %s55
      %s73 = sphi 0, %s73
      %s75 = sphi 0, %s73
      %s76 = sphi 0, %s75
      %s90 = sphi 0, %s76
      %s94 = sphi 0, %s94
      %s96 = sphi 0, %s94
      %s97 = sphi 0, %s96
      %s111 = sphi 0, %s97
      %s115 = sphi 0, %s115
      %s117 = sphi 0, %s115
      %s118 = sphi 0, %s117
      %s132 = sphi 0, %s118
      %s136 = sphi 0, %s136
      %s138 = sphi 0, %s136
      %s139 = sphi 0, %s138
      %s153 = sphi 0, %s139
      %s157 = sphi 0, %s157
      %s159 = sphi 0, %s157
      %s160 = sphi 0, %s159
      %s174 = sphi 0, %s160
      %s180 = sphi 0, %s182
      %s183 = sphi 0, %s180
      %s184 = sphi 0, %s183
      %s200 = sphi 0, %s184
    $region4: #{tpu_custom_call.1} parent=1 // loop_header_branch
      %21 = sbr.rel (%p19) target = $region8
    $region5: #{tpu_custom_call.1} parent=1 // loop_body
      %s23 = ssub.s32 %s18, 1
      %s24 = ssub.s32 %s18, 2
      %s25 = sadd.s32 %s18, 1
      %s26 = ssub.s32 %s18, %s25
      %p27 = scmp.eq.s32.totalorder %s26, 0
      %s29 = sadd.s32 %s28, 1
      %s30 = scalar_select %p27, %s28, %s29
      %p33 = pneg %p27
      %p34 = scmp.eq.s32.totalorder %s18, 1
      %p35 = por %p33, %p34
      %p36 = scmp.ne.s32.totalorder %s28, %s31
      %p37 = scmp.eq.s32.totalorder %s18, 0
      %p38 = por %p36, %p37
      %p39 = scmp.ne.s32.totalorder %s28, %s31
      %p40 = scmp.eq.s32.totalorder %s23, 1
      %p41 = por %p39, %p40
      %p42 = scmp.ne.s32.totalorder %s31, %s32
      %p43 = scmp.eq.s32.totalorder %s23, 0
      %p44 = por %p42, %p43
      %p45 = scmp.ne.s32.totalorder %s31, %s32
      %p46 = scmp.eq.s32.totalorder %s24, 1
      %p47 = por %p45, %p46
      %p49 = scmp.ne.s32.totalorder %s32, %s48
      %p50 = scmp.eq.s32.totalorder %s24, 0
      %p51 = por %p49, %p50
      %s53 = sadd.s32 %s52, 1
      %p56 = scmp.eq.s32.totalorder %s18, 1
      %p57 = scmp.ne.s32.totalorder %s52, %s54
      %p58 = scmp.eq.s32.totalorder %s18, 0
      %p59 = por %p57, %p58
      %p60 = scmp.ne.s32.totalorder %s52, %s54
      %p61 = scmp.eq.s32.totalorder %s23, 1
      %p62 = por %p60, %p61
      %p63 = scmp.ne.s32.totalorder %s54, %s55
      %p64 = scmp.eq.s32.totalorder %s23, 0
      %p65 = por %p63, %p64
      %p66 = scmp.ne.s32.totalorder %s54, %s55
      %p67 = scmp.eq.s32.totalorder %s24, 1
      %p68 = por %p66, %p67
      %p70 = scmp.ne.s32.totalorder %s55, %s69
      %p71 = scmp.eq.s32.totalorder %s24, 0
      %p72 = por %p70, %p71
      %s74 = sadd.s32 %s73, 1
      %p77 = scmp.eq.s32.totalorder %s18, 1
      %p78 = scmp.ne.s32.totalorder %s73, %s75
      %p79 = scmp.eq.s32.totalorder %s18, 0
      %p80 = por %p78, %p79
      %p81 = scmp.ne.s32.totalorder %s73, %s75
      %p82 = scmp.eq.s32.totalorder %s23, 1
      %p83 = por %p81, %p82
      %p84 = scmp.ne.s32.totalorder %s75, %s76
      %p85 = scmp.eq.s32.totalorder %s23, 0
      %p86 = por %p84, %p85
      %p87 = scmp.ne.s32.totalorder %s75, %s76
      %p88 = scmp.eq.s32.totalorder %s24, 1
      %p89 = por %p87, %p88
      %p91 = scmp.ne.s32.totalorder %s76, %s90
      %p92 = scmp.eq.s32.totalorder %s24, 0
      %p93 = por %p91, %p92
      %s95 = sadd.s32 %s94, 1
      %p98 = scmp.eq.s32.totalorder %s18, 1
      %p99 = scmp.ne.s32.totalorder %s94, %s96
      %p100 = scmp.eq.s32.totalorder %s18, 0
      %p101 = por %p99, %p100
      %p102 = scmp.ne.s32.totalorder %s94, %s96
      %p103 = scmp.eq.s32.totalorder %s23, 1
      %p104 = por %p102, %p103
      %p105 = scmp.ne.s32.totalorder %s96, %s97
      %p106 = scmp.eq.s32.totalorder %s23, 0
      %p107 = por %p105, %p106
      %p108 = scmp.ne.s32.totalorder %s96, %s97
      %p109 = scmp.eq.s32.totalorder %s24, 1
      %p110 = por %p108, %p109
      %p112 = scmp.ne.s32.totalorder %s97, %s111
      %p113 = scmp.eq.s32.totalorder %s24, 0
      %p114 = por %p112, %p113
      %s116 = sadd.s32 %s115, 1
      %p119 = scmp.eq.s32.totalorder %s18, 1
      %p120 = scmp.ne.s32.totalorder %s115, %s117
      %p121 = scmp.eq.s32.totalorder %s18, 0
      %p122 = por %p120, %p121
      %p123 = scmp.ne.s32.totalorder %s115, %s117
      %p124 = scmp.eq.s32.totalorder %s23, 1
      %p125 = por %p123, %p124
      %p126 = scmp.ne.s32.totalorder %s117, %s118
      %p127 = scmp.eq.s32.totalorder %s23, 0
      %p128 = por %p126, %p127
      %p129 = scmp.ne.s32.totalorder %s117, %s118
      %p130 = scmp.eq.s32.totalorder %s24, 1
      %p131 = por %p129, %p130
      %p133 = scmp.ne.s32.totalorder %s118, %s132
      %p134 = scmp.eq.s32.totalorder %s24, 0
      %p135 = por %p133, %p134
      %s137 = sadd.s32 %s136, 1
      %p140 = scmp.eq.s32.totalorder %s18, 1
      %p141 = scmp.ne.s32.totalorder %s136, %s138
      %p142 = scmp.eq.s32.totalorder %s18, 0
      %p143 = por %p141, %p142
      %p144 = scmp.ne.s32.totalorder %s136, %s138
      %p145 = scmp.eq.s32.totalorder %s23, 1
      %p146 = por %p144, %p145
      %p147 = scmp.ne.s32.totalorder %s138, %s139
      %p148 = scmp.eq.s32.totalorder %s23, 0
      %p149 = por %p147, %p148
      %p150 = scmp.ne.s32.totalorder %s138, %s139
      %p151 = scmp.eq.s32.totalorder %s24, 1
      %p152 = por %p150, %p151
      %p154 = scmp.ne.s32.totalorder %s139, %s153
      %p155 = scmp.eq.s32.totalorder %s24, 0
      %p156 = por %p154, %p155
      %s158 = sadd.s32 %s157, 1
      %p161 = scmp.eq.s32.totalorder %s18, 1
      %p162 = scmp.ne.s32.totalorder %s157, %s159
      %p163 = scmp.eq.s32.totalorder %s18, 0
      %p164 = por %p162, %p163
      %p165 = scmp.ne.s32.totalorder %s157, %s159
      %p166 = scmp.eq.s32.totalorder %s23, 1
      %p167 = por %p165, %p166
      %p168 = scmp.ne.s32.totalorder %s159, %s160
      %p169 = scmp.eq.s32.totalorder %s23, 0
      %p170 = por %p168, %p169
      %p171 = scmp.ne.s32.totalorder %s159, %s160
      %p172 = scmp.eq.s32.totalorder %s24, 1
      %p173 = por %p171, %p172
      %p175 = scmp.ne.s32.totalorder %s160, %s174
      %p176 = scmp.eq.s32.totalorder %s24, 0
      %p177 = por %p175, %p176
      %s178 = ssub.s32 %s18, %s25
      %p179 = scmp.eq.s32.totalorder %s178, 0
      %s181 = sadd.s32 %s180, 1
      %s182 = scalar_select %p179, %s180, %s181
      %p185 = pneg %p179
      %p186 = scmp.eq.s32.totalorder %s18, 1
      %p187 = por %p185, %p186
      %p188 = scmp.ne.s32.totalorder %s180, %s183
      %p189 = scmp.eq.s32.totalorder %s18, 0
      %p190 = por %p188, %p189
      %p191 = scmp.ne.s32.totalorder %s180, %s183
      %p192 = scmp.eq.s32.totalorder %s23, 1
      %p193 = por %p191, %p192
      %p194 = scmp.ne.s32.totalorder %s183, %s184
      %p195 = scmp.eq.s32.totalorder %s23, 0
      %p196 = por %p194, %p195
      %p197 = scmp.ne.s32.totalorder %s183, %s184
      %p198 = scmp.eq.s32.totalorder %s24, 1
      %p199 = por %p197, %p198
      %p201 = scmp.ne.s32.totalorder %s184, %s200
      %p202 = scmp.eq.s32.totalorder %s24, 0
      %p203 = por %p201, %p202
      %p204 = scmp.le.s32.totalorder 1, %s18
      %p205 = scmp.lt.s32.totalorder %s18, 3
      %p206 = pnand %p204, %p205
      %p207 = pneg %p206
      // Predicated region
      $region9: #{tpu_custom_call.1} parent=5 // pred_check
        _
      $region10: #{tpu_custom_call.1} parent=5 // pred_check_branch
        %209 = sbr.rel (%p206) target = $region12
      $region11: #{tpu_custom_call.1} parent=5 // pred_region
        %s210 = ssub.s32 %s18, 1
        // Predicated region
        $region13: #{tpu_custom_call.1} parent=11 // pred_check
          %p211 = pneg %p65
        $region14: #{tpu_custom_call.1} parent=11 // pred_check_branch
          %213 = sbr.rel (%p211) target = $region16
        $region15: #{tpu_custom_call.1} parent=11 // pred_region
          %s215 = ssub.s32 6144, 6144
          %216 = vsyncadd [#allocation3], %s215
          %s217 = sshll.u32 [#allocation2], 4
          %s218 = int_to_ptr.vmem [resolvable:$true] %s217
          %223 = dma.hbm_to_vmem [thread:$0]  %s1, 6144, %s218, [#allocation3], 64, 64, 4
        $region16: #{tpu_custom_call.1} parent=11 // pred_fallthru
          _
        // Predicated region
        $region17: #{tpu_custom_call.1} parent=11 // pred_check
          %p224 = pneg %p86
        $region18: #{tpu_custom_call.1} parent=11 // pred_check_branch
          %226 = sbr.rel (%p224) target = $region20
        $region19: #{tpu_custom_call.1} parent=11 // pred_region
          _
        $region20: #{tpu_custom_call.1} parent=11 // pred_fallthru
          _
        // Predicated region
        $region21: #{tpu_custom_call.1} parent=11 // pred_check
          %p227 = pneg %p107
        $region22: #{tpu_custom_call.1} parent=11 // pred_check_branch
          %229 = sbr.rel (%p227) target = $region24
        $region23: #{tpu_custom_call.1} parent=11 // pred_region
          _
        $region24: #{tpu_custom_call.1} parent=11 // pred_fallthru
          _
        // Predicated region
        $region25: #{tpu_custom_call.1} parent=11 // pred_check
          %p230 = pneg %p128
        $region26: #{tpu_custom_call.1} parent=11 // pred_check_branch
          %232 = sbr.rel (%p230) target = $region28
        $region27: #{tpu_custom_call.1} parent=11 // pred_region
          _
        $region28: #{tpu_custom_call.1} parent=11 // pred_fallthru
          _
        // Predicated region
        $region29: #{tpu_custom_call.1} parent=11 // pred_check
          %p233 = pneg %p149
        $region30: #{tpu_custom_call.1} parent=11 // pred_check_branch
          %235 = sbr.rel (%p233) target = $region32
        $region31: #{tpu_custom_call.1} parent=11 // pred_region
          %s237 = ssub.s32 1024, 1024
          %238 = vsyncadd [#allocation6], %s237
          %s239 = sshll.u32 [#allocation5], 4
          %s240 = int_to_ptr.vmem [resolvable:$true] %s239
          %245 = dma.hbm_to_vmem [thread:$0]  %s5, 1024, %s240, [#allocation6], 64, 64, 4
        $region32: #{tpu_custom_call.1} parent=11 // pred_fallthru
          _
        // Predicated region
        $region33: #{tpu_custom_call.1} parent=11 // pred_check
          %p246 = pneg %p170
        $region34: #{tpu_custom_call.1} parent=11 // pred_check_branch
          %248 = sbr.rel (%p246) target = $region36
        $region35: #{tpu_custom_call.1} parent=11 // pred_region
          _
        $region36: #{tpu_custom_call.1} parent=11 // pred_fallthru
          _
      $region12: #{tpu_custom_call.1} parent=5 // pred_fallthru
        _
      %p249 = scmp.lt.s32.totalorder %s18, 2
      // Predicated region
      $region37: #{tpu_custom_call.1} parent=5 // pred_check
        %p250 = pneg %p249
      $region38: #{tpu_custom_call.1} parent=5 // pred_check_branch
        %252 = sbr.rel (%p250) target = $region40
      $region39: #{tpu_custom_call.1} parent=5 // pred_region
        // Predicated region
        $region41: #{tpu_custom_call.1} parent=39 // pred_check
          %p253 = pneg %p38
        $region42: #{tpu_custom_call.1} parent=39 // pred_check_branch
          %255 = sbr.rel (%p253) target = $region44
        $region43: #{tpu_custom_call.1} parent=39 // pred_region
          %s256 = smul.u32 4, %s18
          %p257 = scmp.lt.s32.totalorder %s256, 7
          %s258 = scalar_select %p257, %s256, 7
          %s259 = smul.addr %s258, 8
          %s260 = scalar_lea.vmem %s0, %s259
          %s261 = smul.u32 4, %s18
        $region44: #{tpu_custom_call.1} parent=39 // pred_fallthru
          _
      $region40: #{tpu_custom_call.1} parent=5 // pred_fallthru
        _
      %p262 = scmp.le.s32.totalorder 1, %s18
      %p263 = scmp.lt.s32.totalorder %s18, 3
      %p264 = pnand %p262, %p263
      %p265 = pneg %p264
      // Predicated region
      $region45: #{tpu_custom_call.1} parent=5 // pred_check
        _
      $region46: #{tpu_custom_call.1} parent=5 // pred_check_branch
        %267 = sbr.rel (%p264) target = $region48
      $region47: #{tpu_custom_call.1} parent=5 // pred_region
        %s268 = ssub.s32 %s18, 1
        // Predicated region
        $region49: #{tpu_custom_call.1} parent=47 // pred_check
          %p269 = pneg %p65
        $region50: #{tpu_custom_call.1} parent=47 // pred_check_branch
          %271 = sbr.rel (%p269) target = $region52
        $region51: #{tpu_custom_call.1} parent=47 // pred_region
          %272 = dma.done [#allocation3], 6144
        $region52: #{tpu_custom_call.1} parent=47 // pred_fallthru
          _
        // Predicated region
        $region53: #{tpu_custom_call.1} parent=47 // pred_check
          %p273 = pneg %p149
        $region54: #{tpu_custom_call.1} parent=47 // pred_check_branch
          %275 = sbr.rel (%p273) target = $region56
        $region55: #{tpu_custom_call.1} parent=47 // pred_region
          %276 = dma.done [#allocation6], 1024
        $region56: #{tpu_custom_call.1} parent=47 // pred_fallthru
          _
        %s277 = smul.u32 4, %s23
        %p278 = scmp.lt.s32.totalorder %s277, 7
        %s279 = scalar_select %p278, %s277, 7
        %s280 = smul.addr %s279, 8
        %s281 = scalar_lea.vmem %s0, %s280
        %p282 = pneg %p44
        %p283 = pneg %p41
        %p284 = pneg %p65
        %p285 = pneg %p62
        %p286 = pneg %p86
        %p287 = pneg %p83
        %p288 = pneg %p107
        %p289 = pneg %p104
        %p290 = pneg %p128
        %p291 = pneg %p125
        %p292 = pneg %p149
        %p293 = pneg %p146
        %p294 = pneg %p170
        %p295 = pneg %p167
        %p296 = pneg %p196
        %p297 = pneg %p193
        %s298 = sand.u32 %s183, 1
        %s299 = scalar_lea.sflag [#allocation4], %s298
        %s300 = sand.u32 %s183, 1
        %s301 = smul.addr %s300, 16
        %s302 = scalar_lea.vmem [#allocation7], %s301
        %s303 = smul.u32 4, %s23
        %p304 = scmp.lt.s32.totalorder %s303, 7
        %s305 = scalar_select %p304, %s303, 7
        %s306 = smul.addr %s305, 8
        %s307 = scalar_lea.vmem %s0, %s306
        %s308 = smul.u32 4, %s23
        %s309 = smul.u32 4, %s23
        %v311 = vld [vmem:[%s307] sm:$0xff]
        %v312 = vld [vmem:[%s307 + $0x8] sm:$0xff]
        %v313 = vld [vmem:[%s307 + $0x10] sm:$0xff]
        %v314 = vld [vmem:[%s307 + $0x18] sm:$0xff]
        %v315 = vlaneseq
        %v316 = vand.u32 %v315, 127
        %317 = vset.pattern.permute.xlu0 0
        %318 = vperm.xlu0 %317, %v311
        %v319 = vpop.permute.xlu0 %318
        %320 = vset.pattern.permute.xlu0 0
        %321 = vperm.xlu0 %320, %v312
        %v322 = vpop.permute.xlu0 %321
        %323 = vset.pattern.permute.xlu0 0
        %324 = vperm.xlu0 %323, %v313
        %v325 = vpop.permute.xlu0 %324
        %326 = vset.pattern.permute.xlu0 0
        %327 = vperm.xlu0 %326, %v314
        %v328 = vpop.permute.xlu0 %327
        %vm329 = vcmp.eq.s32.totalorder %v316, %v319
        %vm330 = vcmp.eq.s32.totalorder %v316, %v322
        %vm331 = vcmp.eq.s32.totalorder %v316, %v325
        %vm332 = vcmp.eq.s32.totalorder %v316, %v328
        %v333 = vsel %vm329, 1, 0
        %v334 = vsel %vm330, 1, 0
        %v335 = vsel %vm331, 1, 0
        %v336 = vsel %vm332, 1, 0
        %v337 = vcvt.s32.f32 %v333
        %v338 = vcvt.s32.f32 %v334
        %v339 = vcvt.s32.f32 %v335
        %v340 = vcvt.s32.f32 %v336
        %v341 = vpack.c.bf16 %v338, %v337
        %v342 = vpack.c.bf16 %v340, %v339
        %343 = vset.pattern.permute.xlu0 1
        %344 = vperm.xlu0 %343, %v311
        %v345 = vpop.permute.xlu0 %344
        %346 = vset.pattern.permute.xlu0 1
        %347 = vperm.xlu0 %346, %v312
        %v348 = vpop.permute.xlu0 %347
        %349 = vset.pattern.permute.xlu0 1
        %350 = vperm.xlu0 %349, %v313
        %v351 = vpop.permute.xlu0 %350
        %352 = vset.pattern.permute.xlu0 1
        %353 = vperm.xlu0 %352, %v314
        %v354 = vpop.permute.xlu0 %353
        %vm355 = vcmp.eq.s32.totalorder %v316, %v345
        %vm356 = vcmp.eq.s32.totalorder %v316, %v348
        %vm357 = vcmp.eq.s32.totalorder %v316, %v351
        %vm358 = vcmp.eq.s32.totalorder %v316, %v354
        %v359 = vsel %vm355, 1, 0
        %v360 = vsel %vm356, 1, 0
        %v361 = vsel %vm357, 1, 0
        %v362 = vsel %vm358, 1, 0
        %v363 = vcvt.s32.f32 %v359
        %v364 = vcvt.s32.f32 %v360
        %v365 = vcvt.s32.f32 %v361
        %v366 = vcvt.s32.f32 %v362
        %v367 = vpack.c.bf16 %v364, %v363
        %v368 = vpack.c.bf16 %v366, %v365
        %369 = vset.pattern.permute.xlu0 2
        %370 = vperm.xlu0 %369, %v311
        %v371 = vpop.permute.xlu0 %370
        %372 = vset.pattern.permute.xlu0 2
        %373 = vperm.xlu0 %372, %v312
        %v374 = vpop.permute.xlu0 %373
        %375 = vset.pattern.permute.xlu0 2
        %376 = vperm.xlu0 %375, %v313
        %v377 = vpop.permute.xlu0 %376
        %378 = vset.pattern.permute.xlu0 2
        %379 = vperm.xlu0 %378, %v314
        %v380 = vpop.permute.xlu0 %379
        %vm381 = vcmp.eq.s32.totalorder %v316, %v371
        %vm382 = vcmp.eq.s32.totalorder %v316, %v374
        %vm383 = vcmp.eq.s32.totalorder %v316, %v377
        %vm384 = vcmp.eq.s32.totalorder %v316, %v380
        %v385 = vsel %vm381, 1, 0
        %v386 = vsel %vm382, 1, 0
        %v387 = vsel %vm383, 1, 0
        %v388 = vsel %vm384, 1, 0
        %v389 = vcvt.s32.f32 %v385
        %v390 = vcvt.s32.f32 %v386
        %v391 = vcvt.s32.f32 %v387
        %v392 = vcvt.s32.f32 %v388
        %v393 = vpack.c.bf16 %v390, %v389
        %v394 = vpack.c.bf16 %v392, %v391
        %395 = vset.pattern.permute.xlu0 3
        %396 = vperm.xlu0 %395, %v311
        %v397 = vpop.permute.xlu0 %396
        %398 = vset.pattern.permute.xlu0 3
        %399 = vperm.xlu0 %398, %v312
        %v400 = vpop.permute.xlu0 %399
        %401 = vset.pattern.permute.xlu0 3
        %402 = vperm.xlu0 %401, %v313
        %v403 = vpop.permute.xlu0 %402
        %404 = vset.pattern.permute.xlu0 3
        %405 = vperm.xlu0 %404, %v314
        %v406 = vpop.permute.xlu0 %405
        %vm407 = vcmp.eq.s32.totalorder %v316, %v397
        %vm408 = vcmp.eq.s32.totalorder %v316, %v400
        %vm409 = vcmp.eq.s32.totalorder %v316, %v403
        %vm410 = vcmp.eq.s32.totalorder %v316, %v406
        %v411 = vsel %vm407, 1, 0
        %v412 = vsel %vm408, 1, 0
        %v413 = vsel %vm409, 1, 0
        %v414 = vsel %vm410, 1, 0
        %v415 = vcvt.s32.f32 %v411
        %v416 = vcvt.s32.f32 %v412
        %v417 = vcvt.s32.f32 %v413
        %v418 = vcvt.s32.f32 %v414
        %v419 = vpack.c.bf16 %v416, %v415
        %v420 = vpack.c.bf16 %v418, %v417
        %421 = vset.pattern.permute.xlu0 4
        %422 = vperm.xlu0 %421, %v311
        %v423 = vpop.permute.xlu0 %422
        %424 = vset.pattern.permute.xlu0 4
        %425 = vperm.xlu0 %424, %v312
        %v426 = vpop.permute.xlu0 %425
        %427 = vset.pattern.permute.xlu0 4
        %428 = vperm.xlu0 %427, %v313
        %v429 = vpop.permute.xlu0 %428
        %430 = vset.pattern.permute.xlu0 4
        %431 = vperm.xlu0 %430, %v314
        %v432 = vpop.permute.xlu0 %431
        %vm433 = vcmp.eq.s32.totalorder %v316, %v423
        %vm434 = vcmp.eq.s32.totalorder %v316, %v426
        %vm435 = vcmp.eq.s32.totalorder %v316, %v429
        %vm436 = vcmp.eq.s32.totalorder %v316, %v432
        %v437 = vsel %vm433, 1, 0
        %v438 = vsel %vm434, 1, 0
        %v439 = vsel %vm435, 1, 0
        %v440 = vsel %vm436, 1, 0
        %v441 = vcvt.s32.f32 %v437
        %v442 = vcvt.s32.f32 %v438
        %v443 = vcvt.s32.f32 %v439
        %v444 = vcvt.s32.f32 %v440
        %v445 = vpack.c.bf16 %v442, %v441
        %v446 = vpack.c.bf16 %v444, %v443
        %447 = vset.pattern.permute.xlu0 5
        %448 = vperm.xlu0 %447, %v311
        %v449 = vpop.permute.xlu0 %448
        %450 = vset.pattern.permute.xlu0 5
        %451 = vperm.xlu0 %450, %v312
        %v452 = vpop.permute.xlu0 %451
        %453 = vset.pattern.permute.xlu0 5
        %454 = vperm.xlu0 %453, %v313
        %v455 = vpop.permute.xlu0 %454
        %456 = vset.pattern.permute.xlu0 5
        %457 = vperm.xlu0 %456, %v314
        %v458 = vpop.permute.xlu0 %457
        %vm459 = vcmp.eq.s32.totalorder %v316, %v449
        %vm460 = vcmp.eq.s32.totalorder %v316, %v452
        %vm461 = vcmp.eq.s32.totalorder %v316, %v455
        %vm462 = vcmp.eq.s32.totalorder %v316, %v458
        %v463 = vsel %vm459, 1, 0
        %v464 = vsel %vm460, 1, 0
        %v465 = vsel %vm461, 1, 0
        %v466 = vsel %vm462, 1, 0
        %v467 = vcvt.s32.f32 %v463
        %v468 = vcvt.s32.f32 %v464
        %v469 = vcvt.s32.f32 %v465
        %v470 = vcvt.s32.f32 %v466
        %v471 = vpack.c.bf16 %v468, %v467
        %v472 = vpack.c.bf16 %v470, %v469
        %v473 = vld [vmem:[#allocation2] sm:$0xf]
        %v474 = vld [vmem:[#allocation2 + $0x4] sm:$0xf]
        %v475 = vld [vmem:[#allocation2 + $0x8] sm:$0xf]
        %v476 = vld [vmem:[#allocation2 + $0xc] sm:$0xf]
        %v477 = vld [vmem:[#allocation2 + $0x10] sm:$0xf]
        %v478 = vld [vmem:[#allocation2 + $0x14] sm:$0xf]
        %v479 = vld [vmem:[#allocation2 + $0x18] sm:$0xf]
        %v480 = vld [vmem:[#allocation2 + $0x1c] sm:$0xf]
        %v481 = vld [vmem:[#allocation2 + $0x20] sm:$0xf]
        %v482 = vld [vmem:[#allocation2 + $0x24] sm:$0xf]
        %v483 = vld [vmem:[#allocation2 + $0x28] sm:$0xf]
        %v484 = vld [vmem:[#allocation2 + $0x2c] sm:$0xf]
        %v485 = vld [vmem:[#allocation2 + $0x30] sm:$0xf]
        %v486 = vld [vmem:[#allocation2 + $0x34] sm:$0xf]
        %v487 = vld [vmem:[#allocation2 + $0x38] sm:$0xf]
        %v488 = vld [vmem:[#allocation2 + $0x3c] sm:$0xf]
        %v489 = vld [vmem:[#allocation2 + $0x40] sm:$0xf]
        %v490 = vld [vmem:[#allocation2 + $0x44] sm:$0xf]
        %v491 = vld [vmem:[#allocation2 + $0x48] sm:$0xf]
        %v492 = vld [vmem:[#allocation2 + $0x4c] sm:$0xf]
        %v493 = vld [vmem:[#allocation2 + $0x50] sm:$0xf]
        %v494 = vld [vmem:[#allocation2 + $0x54] sm:$0xf]
        %v495 = vld [vmem:[#allocation2 + $0x58] sm:$0xf]
        %v496 = vld [vmem:[#allocation2 + $0x5c] sm:$0xf]
        %v497 = vld [vmem:[#allocation2 + $0x60] sm:$0xf]
        %v498 = vld [vmem:[#allocation2 + $0x64] sm:$0xf]
        %v499 = vld [vmem:[#allocation2 + $0x68] sm:$0xf]
        %v500 = vld [vmem:[#allocation2 + $0x6c] sm:$0xf]
        %v501 = vld [vmem:[#allocation2 + $0x70] sm:$0xf]
        %v502 = vld [vmem:[#allocation2 + $0x74] sm:$0xf]
        %v503 = vld [vmem:[#allocation2 + $0x78] sm:$0xf]
        %v504 = vld [vmem:[#allocation2 + $0x7c] sm:$0xf]
        %v505 = vld [vmem:[#allocation2 + $0x80] sm:$0xf]
        %v506 = vld [vmem:[#allocation2 + $0x84] sm:$0xf]
        %v507 = vld [vmem:[#allocation2 + $0x88] sm:$0xf]
        %v508 = vld [vmem:[#allocation2 + $0x8c] sm:$0xf]
        %v509 = vld [vmem:[#allocation2 + $0x90] sm:$0xf]
        %v510 = vld [vmem:[#allocation2 + $0x94] sm:$0xf]
        %v511 = vld [vmem:[#allocation2 + $0x98] sm:$0xf]
        %v512 = vld [vmem:[#allocation2 + $0x9c] sm:$0xf]
        %v513 = vld [vmem:[#allocation2 + $0xa0] sm:$0xf]
        %v514 = vld [vmem:[#allocation2 + $0xa4] sm:$0xf]
        %v515 = vld [vmem:[#allocation2 + $0xa8] sm:$0xf]
        %v516 = vld [vmem:[#allocation2 + $0xac] sm:$0xf]
        %v517 = vld [vmem:[#allocation2 + $0xb0] sm:$0xf]
        %v518 = vld [vmem:[#allocation2 + $0xb4] sm:$0xf]
        %v519 = vld [vmem:[#allocation2 + $0xb8] sm:$0xf]
        %v520 = vld [vmem:[#allocation2 + $0xbc] sm:$0xf]
        %v521 = vld [vmem:[#allocation2 + $0xc0] sm:$0xf]
        %v522 = vld [vmem:[#allocation2 + $0xc4] sm:$0xf]
        %v523 = vld [vmem:[#allocation2 + $0xc8] sm:$0xf]
        %v524 = vld [vmem:[#allocation2 + $0xcc] sm:$0xf]
        %v525 = vld [vmem:[#allocation2 + $0xd0] sm:$0xf]
        %v526 = vld [vmem:[#allocation2 + $0xd4] sm:$0xf]
        %v527 = vld [vmem:[#allocation2 + $0xd8] sm:$0xf]
        %v528 = vld [vmem:[#allocation2 + $0xdc] sm:$0xf]
        %v529 = vld [vmem:[#allocation2 + $0xe0] sm:$0xf]
        %v530 = vld [vmem:[#allocation2 + $0xe4] sm:$0xf]
        %v531 = vld [vmem:[#allocation2 + $0xe8] sm:$0xf]
        %v532 = vld [vmem:[#allocation2 + $0xec] sm:$0xf]
        %v533 = vld [vmem:[#allocation2 + $0xf0] sm:$0xf]
        %v534 = vld [vmem:[#allocation2 + $0xf4] sm:$0xf]
        %v535 = vld [vmem:[#allocation2 + $0xf8] sm:$0xf]
        %v536 = vld [vmem:[#allocation2 + $0xfc] sm:$0xf]
        %v537 = vld [vmem:[#allocation2 + $0x100] sm:$0xf]
        %v538 = vld [vmem:[#allocation2 + $0x104] sm:$0xf]
        %v539 = vld [vmem:[#allocation2 + $0x108] sm:$0xf]
        %v540 = vld [vmem:[#allocation2 + $0x10c] sm:$0xf]
        %v541 = vld [vmem:[#allocation2 + $0x110] sm:$0xf]
        %v542 = vld [vmem:[#allocation2 + $0x114] sm:$0xf]
        %v543 = vld [vmem:[#allocation2 + $0x118] sm:$0xf]
        %v544 = vld [vmem:[#allocation2 + $0x11c] sm:$0xf]
        %v545 = vld [vmem:[#allocation2 + $0x120] sm:$0xf]
        %v546 = vld [vmem:[#allocation2 + $0x124] sm:$0xf]
        %v547 = vld [vmem:[#allocation2 + $0x128] sm:$0xf]
        %v548 = vld [vmem:[#allocation2 + $0x12c] sm:$0xf]
        %v549 = vld [vmem:[#allocation2 + $0x130] sm:$0xf]
        %v550 = vld [vmem:[#allocation2 + $0x134] sm:$0xf]
        %v551 = vld [vmem:[#allocation2 + $0x138] sm:$0xf]
        %v552 = vld [vmem:[#allocation2 + $0x13c] sm:$0xf]
        %v553 = vld [vmem:[#allocation2 + $0x140] sm:$0xf]
        %v554 = vld [vmem:[#allocation2 + $0x144] sm:$0xf]
        %v555 = vld [vmem:[#allocation2 + $0x148] sm:$0xf]
        %v556 = vld [vmem:[#allocation2 + $0x14c] sm:$0xf]
        %v557 = vld [vmem:[#allocation2 + $0x150] sm:$0xf]
        %v558 = vld [vmem:[#allocation2 + $0x154] sm:$0xf]
        %v559 = vld [vmem:[#allocation2 + $0x158] sm:$0xf]
        %v560 = vld [vmem:[#allocation2 + $0x15c] sm:$0xf]
        %v561 = vld [vmem:[#allocation2 + $0x160] sm:$0xf]
        %v562 = vld [vmem:[#allocation2 + $0x164] sm:$0xf]
        %v563 = vld [vmem:[#allocation2 + $0x168] sm:$0xf]
        %v564 = vld [vmem:[#allocation2 + $0x16c] sm:$0xf]
        %v565 = vld [vmem:[#allocation2 + $0x170] sm:$0xf]
        %v566 = vld [vmem:[#allocation2 + $0x174] sm:$0xf]
        %v567 = vld [vmem:[#allocation2 + $0x178] sm:$0xf]
        %v568 = vld [vmem:[#allocation2 + $0x17c] sm:$0xf]
        %v569 = vld [vmem:[%s2] sm:$0x1]
        %v571 = vlaneseq
        %v572 = vshrl.u32 %v571, 7
        %v573 = vsub.s32 0, %v572
        %v574 = vrot.slane %v569, %v573
        %v672 = vunpack.c.l.b16 %v473
        %v673 = vunpack.c.l.b16 %v474
        %v674 = vunpack.c.l.b16 %v475
        %v675 = vunpack.c.l.b16 %v476
        %v676 = vunpack.c.l.b16 %v477
        %v677 = vunpack.c.l.b16 %v478
        %v678 = vunpack.c.l.b16 %v479
        %v679 = vunpack.c.l.b16 %v480
        %v680 = vunpack.c.l.b16 %v481
        %v681 = vunpack.c.l.b16 %v482
        %v682 = vunpack.c.l.b16 %v483
        %v683 = vunpack.c.l.b16 %v484
        %v684 = vunpack.c.l.b16 %v485
        %v685 = vunpack.c.l.b16 %v486
        %v686 = vunpack.c.l.b16 %v487
        %v687 = vunpack.c.l.b16 %v488
        %v688 = vunpack.c.l.b16 %v489
        %v689 = vunpack.c.l.b16 %v490
        %v690 = vunpack.c.l.b16 %v491
        %v691 = vunpack.c.l.b16 %v492
        %v692 = vunpack.c.l.b16 %v493
        %v693 = vunpack.c.l.b16 %v494
        %v694 = vunpack.c.l.b16 %v495
        %v695 = vunpack.c.l.b16 %v496
        %v696 = vunpack.c.l.b16 %v497
        %v697 = vunpack.c.l.b16 %v498
        %v698 = vunpack.c.l.b16 %v499
        %v699 = vunpack.c.l.b16 %v500
        %v700 = vunpack.c.l.b16 %v501
        %v701 = vunpack.c.l.b16 %v502
        %v702 = vunpack.c.l.b16 %v503
        %v703 = vunpack.c.l.b16 %v504
        %v704 = vunpack.c.l.b16 %v505
        %v705 = vunpack.c.l.b16 %v506
        %v706 = vunpack.c.l.b16 %v507
        %v707 = vunpack.c.l.b16 %v508
        %v708 = vunpack.c.l.b16 %v509
        %v709 = vunpack.c.l.b16 %v510
        %v710 = vunpack.c.l.b16 %v511
        %v711 = vunpack.c.l.b16 %v512
        %v712 = vunpack.c.l.b16 %v513
        %v713 = vunpack.c.l.b16 %v514
        %v714 = vunpack.c.l.b16 %v515
        %v715 = vunpack.c.l.b16 %v516
        %v716 = vunpack.c.l.b16 %v517
        %v717 = vunpack.c.l.b16 %v518
        %v718 = vunpack.c.l.b16 %v519
        %v719 = vunpack.c.l.b16 %v520
        %v720 = vunpack.c.l.b16 %v521
        %v721 = vunpack.c.l.b16 %v522
        %v722 = vunpack.c.l.b16 %v523
        %v723 = vunpack.c.l.b16 %v524
        %v724 = vunpack.c.l.b16 %v525
        %v725 = vunpack.c.l.b16 %v526
        %v726 = vunpack.c.l.b16 %v527
        %v727 = vunpack.c.l.b16 %v528
        %v728 = vunpack.c.l.b16 %v529
        %v729 = vunpack.c.l.b16 %v530
        %v730 = vunpack.c.l.b16 %v531
        %v731 = vunpack.c.l.b16 %v532
        %v732 = vunpack.c.l.b16 %v533
        %v733 = vunpack.c.l.b16 %v534
        %v734 = vunpack.c.l.b16 %v535
        %v735 = vunpack.c.l.b16 %v536
        %v736 = vunpack.c.l.b16 %v537
        %v737 = vunpack.c.l.b16 %v538
        %v738 = vunpack.c.l.b16 %v539
        %v739 = vunpack.c.l.b16 %v540
        %v740 = vunpack.c.l.b16 %v541
        %v741 = vunpack.c.l.b16 %v542
        %v742 = vunpack.c.l.b16 %v543
        %v743 = vunpack.c.l.b16 %v544
        %v744 = vunpack.c.l.b16 %v545
        %v745 = vunpack.c.l.b16 %v546
        %v746 = vunpack.c.l.b16 %v547
        %v747 = vunpack.c.l.b16 %v548
        %v748 = vunpack.c.l.b16 %v549
        %v749 = vunpack.c.l.b16 %v550
        %v750 = vunpack.c.l.b16 %v551
        %v751 = vunpack.c.l.b16 %v552
        %v752 = vunpack.c.l.b16 %v553
        %v753 = vunpack.c.l.b16 %v554
        %v754 = vunpack.c.l.b16 %v555
        %v755 = vunpack.c.l.b16 %v556
        %v756 = vunpack.c.l.b16 %v557
        %v757 = vunpack.c.l.b16 %v558
        %v758 = vunpack.c.l.b16 %v559
        %v759 = vunpack.c.l.b16 %v560
        %v760 = vunpack.c.l.b16 %v561
        %v761 = vunpack.c.l.b16 %v562
        %v762 = vunpack.c.l.b16 %v563
        %v763 = vunpack.c.l.b16 %v564
        %v764 = vunpack.c.l.b16 %v565
        %v765 = vunpack.c.l.b16 %v566
        %v766 = vunpack.c.l.b16 %v567
        %v767 = vunpack.c.l.b16 %v568
        %v768 = vpack.c.b16 %v673, %v672
        %v769 = vpack.c.b16 %v675, %v674
        %v770 = vpack.c.b16 %v677, %v676
        %v771 = vpack.c.b16 %v679, %v678
        %v772 = vpack.c.b16 %v681, %v680
        %v773 = vpack.c.b16 %v683, %v682
        %v774 = vpack.c.b16 %v685, %v684
        %v775 = vpack.c.b16 %v687, %v686
        %v776 = vpack.c.b16 %v689, %v688
        %v777 = vpack.c.b16 %v691, %v690
        %v778 = vpack.c.b16 %v693, %v692
        %v779 = vpack.c.b16 %v695, %v694
        %v780 = vpack.c.b16 %v697, %v696
        %v781 = vpack.c.b16 %v699, %v698
        %v782 = vpack.c.b16 %v701, %v700
        %v783 = vpack.c.b16 %v703, %v702
        %v784 = vpack.c.b16 %v705, %v704
        %v785 = vpack.c.b16 %v707, %v706
        %v786 = vpack.c.b16 %v709, %v708
        %v787 = vpack.c.b16 %v711, %v710
        %v788 = vpack.c.b16 %v713, %v712
        %v789 = vpack.c.b16 %v715, %v714
        %v790 = vpack.c.b16 %v717, %v716
        %v791 = vpack.c.b16 %v719, %v718
        %v792 = vpack.c.b16 %v721, %v720
        %v793 = vpack.c.b16 %v723, %v722
        %v794 = vpack.c.b16 %v725, %v724
        %v795 = vpack.c.b16 %v727, %v726
        %v796 = vpack.c.b16 %v729, %v728
        %v797 = vpack.c.b16 %v731, %v730
        %v798 = vpack.c.b16 %v733, %v732
        %v799 = vpack.c.b16 %v735, %v734
        %v800 = vpack.c.b16 %v737, %v736
        %v801 = vpack.c.b16 %v739, %v738
        %v802 = vpack.c.b16 %v741, %v740
        %v803 = vpack.c.b16 %v743, %v742
        %v804 = vpack.c.b16 %v745, %v744
        %v805 = vpack.c.b16 %v747, %v746
        %v806 = vpack.c.b16 %v749, %v748
        %v807 = vpack.c.b16 %v751, %v750
        %v808 = vpack.c.b16 %v753, %v752
        %v809 = vpack.c.b16 %v755, %v754
        %v810 = vpack.c.b16 %v757, %v756
        %v811 = vpack.c.b16 %v759, %v758
        %v812 = vpack.c.b16 %v761, %v760
        %v813 = vpack.c.b16 %v763, %v762
        %v814 = vpack.c.b16 %v765, %v764
        %v815 = vpack.c.b16 %v767, %v766
        %864 = vmatprep.subr.bf16.mxu0 0
        %865 = vmatpush1.bf16.msra.mxu0 %v768
        %866 = vmatprep.subr.bf16.mxu0 0
        %867 = vmatpush1.bf16.msra.mxu0 %v769
        %868 = vmatprep.subr.bf16.mxu0 0
        %869 = vmatpush1.bf16.msra.mxu0 %v770
        %870 = vmatprep.subr.bf16.mxu0 0
        %871 = vmatpush1.bf16.msra.mxu0 %v771
        %872 = vmatprep.subr.bf16.mxu0 0
        %873 = vmatpush1.bf16.msra.mxu0 %v772
        %874 = vmatprep.subr.bf16.mxu0 0
        %875 = vmatpush1.bf16.msra.mxu0 %v773
        %876 = vmatprep.subr.bf16.mxu0 0
        %877 = vmatpush1.bf16.msra.mxu0 %v774
        %878 = vmatprep.subr.bf16.mxu0 0
        %879 = vmatpush1.bf16.msra.mxu0 %v775
        %880 = vmatprep.subr.bf16.mxu0 0
        %881 = vmatpush1.bf16.msra.mxu0 %v776
        %882 = vmatprep.subr.bf16.mxu0 0
        %883 = vmatpush1.bf16.msra.mxu0 %v777
        %884 = vmatprep.subr.bf16.mxu0 0
        %885 = vmatpush1.bf16.msra.mxu0 %v778
        %886 = vmatprep.subr.bf16.mxu0 0
        %887 = vmatpush1.bf16.msra.mxu0 %v779
        %888 = vmatprep.subr.bf16.mxu0 0
        %889 = vmatpush1.bf16.msra.mxu0 %v780
        %890 = vmatprep.subr.bf16.mxu0 0
        %891 = vmatpush1.bf16.msra.mxu0 %v781
        %892 = vmatprep.subr.bf16.mxu0 0
        %893 = vmatpush1.bf16.msra.mxu0 %v782
        %894 = vmatprep.subr.bf16.mxu0 0
        %895 = vmatpush1.bf16.msra.mxu0 %v783
        %896 = vmatprep.mubr.bf16.mxu0 %v367
        %897 = vmatmul.mubr.bf16.gmra.mrb[0].mxu0 %v341
        %v898 = vpop.f32.mrb[0].mxu0
        %v899 = vadd.f32 %v574, %v898
        %v900 = vpop.f32.mrb[0].mxu0
        %v901 = vpop.f32.mrb[0].mxu0
        %v902 = vadd.f32 %v574, %v901
        %v903 = vpop.f32.mrb[0].mxu0
        %904 = vmatprep.mubr.bf16.mxu0 %v368
        %905 = vmatmul.mubr.bf16.gmra.mrb[0].mxu0 %v342
        %v906 = vpop.f32.mrb[0].mxu0
        %v907 = vadd.f32 %v574, %v906
        %v908 = vpop.f32.mrb[0].mxu0
        %v909 = vpop.f32.mrb[0].mxu0
        %v910 = vadd.f32 %v574, %v909
        %v911 = vpop.f32.mrb[0].mxu0
        %912 = vdwg.mxu0
        %913 = vmatprep.subr.bf16.mxu0 0
        %914 = vmatpush1.bf16.msra.mxu0 %v784
        %915 = vmatprep.subr.bf16.mxu0 0
        %916 = vmatpush1.bf16.msra.mxu0 %v785
        %917 = vmatprep.subr.bf16.mxu0 0
        %918 = vmatpush1.bf16.msra.mxu0 %v786
        %919 = vmatprep.subr.bf16.mxu0 0
        %920 = vmatpush1.bf16.msra.mxu0 %v787
        %921 = vmatprep.subr.bf16.mxu0 0
        %922 = vmatpush1.bf16.msra.mxu0 %v788
        %923 = vmatprep.subr.bf16.mxu0 0
        %924 = vmatpush1.bf16.msra.mxu0 %v789
        %925 = vmatprep.subr.bf16.mxu0 0
        %926 = vmatpush1.bf16.msra.mxu0 %v790
        %927 = vmatprep.subr.bf16.mxu0 0
        %928 = vmatpush1.bf16.msra.mxu0 %v791
        %929 = vmatprep.subr.bf16.mxu0 0
        %930 = vmatpush1.bf16.msra.mxu0 %v792
        %931 = vmatprep.subr.bf16.mxu0 0
        %932 = vmatpush1.bf16.msra.mxu0 %v793
        %933 = vmatprep.subr.bf16.mxu0 0
        %934 = vmatpush1.bf16.msra.mxu0 %v794
        %935 = vmatprep.subr.bf16.mxu0 0
        %936 = vmatpush1.bf16.msra.mxu0 %v795
        %937 = vmatprep.subr.bf16.mxu0 0
        %938 = vmatpush1.bf16.msra.mxu0 %v796
        %939 = vmatprep.subr.bf16.mxu0 0
        %940 = vmatpush1.bf16.msra.mxu0 %v797
        %941 = vmatprep.subr.bf16.mxu0 0
        %942 = vmatpush1.bf16.msra.mxu0 %v798
        %943 = vmatprep.subr.bf16.mxu0 0
        %944 = vmatpush1.bf16.msra.mxu0 %v799
        %945 = vmatprep.mubr.bf16.mxu0 %v419
        %946 = vmatmul.mubr.bf16.gmra.mrb[0].mxu0 %v393
        %v947 = vpop.f32.mrb[0].mxu0
        %v948 = vadd.f32 %v899, %v947
        %v949 = vpop.f32.mrb[0].mxu0
        %v950 = vpop.f32.mrb[0].mxu0
        %v951 = vadd.f32 %v902, %v950
        %v952 = vpop.f32.mrb[0].mxu0
        %953 = vmatprep.mubr.bf16.mxu0 %v420
        %954 = vmatmul.mubr.bf16.gmra.mrb[0].mxu0 %v394
        %v955 = vpop.f32.mrb[0].mxu0
        %v956 = vadd.f32 %v907, %v955
        %v957 = vpop.f32.mrb[0].mxu0
        %v958 = vpop.f32.mrb[0].mxu0
        %v959 = vadd.f32 %v910, %v958
        %v960 = vpop.f32.mrb[0].mxu0
        %961 = vdwg.mxu0
        %962 = vmatprep.subr.bf16.mxu0 0
        %963 = vmatpush1.bf16.msra.mxu0 %v800
        %964 = vmatprep.subr.bf16.mxu0 0
        %965 = vmatpush1.bf16.msra.mxu0 %v801
        %966 = vmatprep.subr.bf16.mxu0 0
        %967 = vmatpush1.bf16.msra.mxu0 %v802
        %968 = vmatprep.subr.bf16.mxu0 0
        %969 = vmatpush1.bf16.msra.mxu0 %v803
        %970 = vmatprep.subr.bf16.mxu0 0
        %971 = vmatpush1.bf16.msra.mxu0 %v804
        %972 = vmatprep.subr.bf16.mxu0 0
        %973 = vmatpush1.bf16.msra.mxu0 %v805
        %974 = vmatprep.subr.bf16.mxu0 0
        %975 = vmatpush1.bf16.msra.mxu0 %v806
        %976 = vmatprep.subr.bf16.mxu0 0
        %977 = vmatpush1.bf16.msra.mxu0 %v807
        %978 = vmatprep.subr.bf16.mxu0 0
        %979 = vmatpush1.bf16.msra.mxu0 %v808
        %980 = vmatprep.subr.bf16.mxu0 0
        %981 = vmatpush1.bf16.msra.mxu0 %v809
        %982 = vmatprep.subr.bf16.mxu0 0
        %983 = vmatpush1.bf16.msra.mxu0 %v810
        %984 = vmatprep.subr.bf16.mxu0 0
        %985 = vmatpush1.bf16.msra.mxu0 %v811
        %986 = vmatprep.subr.bf16.mxu0 0
        %987 = vmatpush1.bf16.msra.mxu0 %v812
        %988 = vmatprep.subr.bf16.mxu0 0
        %989 = vmatpush1.bf16.msra.mxu0 %v813
        %990 = vmatprep.subr.bf16.mxu0 0
        %991 = vmatpush1.bf16.msra.mxu0 %v814
        %992 = vmatprep.subr.bf16.mxu0 0
        %993 = vmatpush1.bf16.msra.mxu0 %v815
        %994 = vmatprep.mubr.bf16.mxu0 %v471
        %995 = vmatmul.mubr.bf16.gmra.mrb[0].mxu0 %v445
        %v996 = vpop.f32.mrb[0].mxu0
        %v997 = vadd.f32 %v948, %v996
        %v998 = vpop.f32.mrb[0].mxu0
        %v999 = vpop.f32.mrb[0].mxu0
        %v1000 = vadd.f32 %v951, %v999
        %v1001 = vpop.f32.mrb[0].mxu0
        %1002 = vmatprep.mubr.bf16.mxu0 %v472
        %1003 = vmatmul.mubr.bf16.gmra.mrb[0].mxu0 %v446
        %v1004 = vpop.f32.mrb[0].mxu0
        %v1005 = vadd.f32 %v956, %v1004
        %v1006 = vpop.f32.mrb[0].mxu0
        %v1007 = vpop.f32.mrb[0].mxu0
        %v1008 = vadd.f32 %v959, %v1007
        %v1009 = vpop.f32.mrb[0].mxu0
        %1010 = vdwg.mxu0
        %v1011 = vmax.f32 %v997, 0.0
        %v1012 = vmax.f32 %v1000, 0.0
        %v1013 = vmax.f32 %v1005, 0.0
        %v1014 = vmax.f32 %v1008, 0.0
        %v1015 = vpack.c.bf16 %v1012, %v1011
        %v1016 = vpack.c.bf16 %v1014, %v1013
        %v1017 = vld [vmem:[%s3] sm:$0xf]
        %v1018 = vld [vmem:[%s3 + $0x4] sm:$0xf]
        %v1019 = vld [vmem:[%s3 + $0x8] sm:$0xf]
        %v1020 = vld [vmem:[%s3 + $0xc] sm:$0xf]
        %v1021 = vld [vmem:[%s3 + $0x10] sm:$0xf]
        %v1022 = vld [vmem:[%s3 + $0x14] sm:$0xf]
        %v1023 = vld [vmem:[%s3 + $0x18] sm:$0xf]
        %v1024 = vld [vmem:[%s3 + $0x1c] sm:$0xf]
        %v1025 = vld [vmem:[%s3 + $0x20] sm:$0xf]
        %v1026 = vld [vmem:[%s3 + $0x24] sm:$0xf]
        %v1027 = vld [vmem:[%s3 + $0x28] sm:$0xf]
        %v1028 = vld [vmem:[%s3 + $0x2c] sm:$0xf]
        %v1029 = vld [vmem:[%s3 + $0x30] sm:$0xf]
        %v1030 = vld [vmem:[%s3 + $0x34] sm:$0xf]
        %v1031 = vld [vmem:[%s3 + $0x38] sm:$0xf]
        %v1032 = vld [vmem:[%s3 + $0x3c] sm:$0xf]
        %v1033 = vld [vmem:[%s4] sm:$0x1]
        %v1035 = vlaneseq
        %v1036 = vshrl.u32 %v1035, 7
        %v1037 = vsub.s32 0, %v1036
        %v1038 = vrot.slane %v1033, %v1037
        %v1056 = vunpack.c.l.b16 %v1017
        %v1057 = vunpack.c.l.b16 %v1018
        %v1058 = vunpack.c.l.b16 %v1019
        %v1059 = vunpack.c.l.b16 %v1020
        %v1060 = vunpack.c.l.b16 %v1021
        %v1061 = vunpack.c.l.b16 %v1022
        %v1062 = vunpack.c.l.b16 %v1023
        %v1063 = vunpack.c.l.b16 %v1024
        %v1064 = vunpack.c.l.b16 %v1025
        %v1065 = vunpack.c.l.b16 %v1026
        %v1066 = vunpack.c.l.b16 %v1027
        %v1067 = vunpack.c.l.b16 %v1028
        %v1068 = vunpack.c.l.b16 %v1029
        %v1069 = vunpack.c.l.b16 %v1030
        %v1070 = vunpack.c.l.b16 %v1031
        %v1071 = vunpack.c.l.b16 %v1032
        %v1072 = vpack.c.b16 %v1057, %v1056
        %v1073 = vpack.c.b16 %v1059, %v1058
        %v1074 = vpack.c.b16 %v1061, %v1060
        %v1075 = vpack.c.b16 %v1063, %v1062
        %v1076 = vpack.c.b16 %v1065, %v1064
        %v1077 = vpack.c.b16 %v1067, %v1066
        %v1078 = vpack.c.b16 %v1069, %v1068
        %v1079 = vpack.c.b16 %v1071, %v1070
        %1088 = vmatprep.subr.bf16.mxu0 0
        %1089 = vmatpush1.bf16.msra.mxu0 %v1072
        %1090 = vmatprep.subr.bf16.mxu0 0
        %1091 = vmatpush1.bf16.msra.mxu0 %v1073
        %1092 = vmatprep.subr.bf16.mxu0 0
        %1093 = vmatpush1.bf16.msra.mxu0 %v1074
        %1094 = vmatprep.subr.bf16.mxu0 0
        %1095 = vmatpush1.bf16.msra.mxu0 %v1075
        %1096 = vmatprep.subr.bf16.mxu0 0
        %1097 = vmatpush1.bf16.msra.mxu0 %v1076
        %1098 = vmatprep.subr.bf16.mxu0 0
        %1099 = vmatpush1.bf16.msra.mxu0 %v1077
        %1100 = vmatprep.subr.bf16.mxu0 0
        %1101 = vmatpush1.bf16.msra.mxu0 %v1078
        %1102 = vmatprep.subr.bf16.mxu0 0
        %1103 = vmatpush1.bf16.msra.mxu0 %v1079
        %1104 = vmatprep.subr.bf16.mxu0 0
        %1105 = vmatpush1.bf16.msra.mxu0 0
        %1106 = vmatprep.subr.bf16.mxu0 0
        %1107 = vmatpush1.bf16.msra.mxu0 0
        %1108 = vmatprep.subr.bf16.mxu0 0
        %1109 = vmatpush1.bf16.msra.mxu0 0
        %1110 = vmatprep.subr.bf16.mxu0 0
        %1111 = vmatpush1.bf16.msra.mxu0 0
        %1112 = vmatprep.subr.bf16.mxu0 0
        %1113 = vmatpush1.bf16.msra.mxu0 0
        %1114 = vmatprep.subr.bf16.mxu0 0
        %1115 = vmatpush1.bf16.msra.mxu0 0
        %1116 = vmatprep.subr.bf16.mxu0 0
        %1117 = vmatpush1.bf16.msra.mxu0 0
        %1118 = vmatprep.subr.bf16.mxu0 0
        %1119 = vmatpush1.bf16.msra.mxu0 0
        %1120 = vmatprep.mubr.bf16.mxu0 0
        %1121 = vmatmul.mubr.bf16.gmra.mrb[0].mxu0 %v1015
        %v1122 = vpop.f32.mrb[0].mxu0
        %v1123 = vadd.f32 %v1038, %v1122
        %v1124 = vpop.f32.mrb[0].mxu0
        %v1125 = vpop.f32.mrb[0].mxu0
        %v1126 = vadd.f32 %v1038, %v1125
        %v1127 = vpop.f32.mrb[0].mxu0
        %1128 = vmatprep.mubr.bf16.mxu0 0
        %1129 = vmatmul.mubr.bf16.gmra.mrb[0].mxu0 %v1016
        %v1130 = vpop.f32.mrb[0].mxu0
        %v1131 = vadd.f32 %v1038, %v1130
        %v1132 = vpop.f32.mrb[0].mxu0
        %v1133 = vpop.f32.mrb[0].mxu0
        %v1134 = vadd.f32 %v1038, %v1133
        %v1135 = vpop.f32.mrb[0].mxu0
        %1136 = vdwg.mxu0
        %v1137 = vmax.f32 %v1123, 0.0
        %v1138 = vmax.f32 %v1126, 0.0
        %v1139 = vmax.f32 %v1131, 0.0
        %v1140 = vmax.f32 %v1134, 0.0
        %v1141 = vpack.c.bf16 %v1138, %v1137
        %v1142 = vpack.c.bf16 %v1140, %v1139
        %v1143 = vld [vmem:[#allocation5] sm:$0xf]
        %v1144 = vld [vmem:[#allocation5 + $0x4] sm:$0xf]
        %v1145 = vld [vmem:[#allocation5 + $0x8] sm:$0xf]
        %v1146 = vld [vmem:[#allocation5 + $0xc] sm:$0xf]
        %v1147 = vld [vmem:[#allocation5 + $0x10] sm:$0xf]
        %v1148 = vld [vmem:[#allocation5 + $0x14] sm:$0xf]
        %v1149 = vld [vmem:[#allocation5 + $0x18] sm:$0xf]
        %v1150 = vld [vmem:[#allocation5 + $0x1c] sm:$0xf]
        %v1151 = vld [vmem:[#allocation5 + $0x20] sm:$0xf]
        %v1152 = vld [vmem:[#allocation5 + $0x24] sm:$0xf]
        %v1153 = vld [vmem:[#allocation5 + $0x28] sm:$0xf]
        %v1154 = vld [vmem:[#allocation5 + $0x2c] sm:$0xf]
        %v1155 = vld [vmem:[#allocation5 + $0x30] sm:$0xf]
        %v1156 = vld [vmem:[#allocation5 + $0x34] sm:$0xf]
        %v1157 = vld [vmem:[#allocation5 + $0x38] sm:$0xf]
        %v1158 = vld [vmem:[#allocation5 + $0x3c] sm:$0xf]
        %v1159 = vld [vmem:[%s6] sm:$0x1]
        %v1161 = vlaneseq
        %v1162 = vshrl.u32 %v1161, 7
        %v1163 = vsub.s32 0, %v1162
        %v1164 = vrot.slane %v1159, %v1163
        %v1182 = vunpack.c.l.b16 %v1143
        %v1183 = vunpack.c.l.b16 %v1144
        %v1184 = vunpack.c.l.b16 %v1145
        %v1185 = vunpack.c.l.b16 %v1146
        %v1186 = vunpack.c.l.b16 %v1147
        %v1187 = vunpack.c.l.b16 %v1148
        %v1188 = vunpack.c.l.b16 %v1149
        %v1189 = vunpack.c.l.b16 %v1150
        %v1190 = vunpack.c.l.b16 %v1151
        %v1191 = vunpack.c.l.b16 %v1152
        %v1192 = vunpack.c.l.b16 %v1153
        %v1193 = vunpack.c.l.b16 %v1154
        %v1194 = vunpack.c.l.b16 %v1155
        %v1195 = vunpack.c.l.b16 %v1156
        %v1196 = vunpack.c.l.b16 %v1157
        %v1197 = vunpack.c.l.b16 %v1158
        %v1198 = vpack.c.b16 %v1183, %v1182
        %v1199 = vpack.c.b16 %v1185, %v1184
        %v1200 = vpack.c.b16 %v1187, %v1186
        %v1201 = vpack.c.b16 %v1189, %v1188
        %v1202 = vpack.c.b16 %v1191, %v1190
        %v1203 = vpack.c.b16 %v1193, %v1192
        %v1204 = vpack.c.b16 %v1195, %v1194
        %v1205 = vpack.c.b16 %v1197, %v1196
        %1214 = vmatprep.subr.bf16.mxu0 0
        %1215 = vmatpush1.bf16.msra.mxu0 %v1198
        %1216 = vmatprep.subr.bf16.mxu0 0
        %1217 = vmatpush1.bf16.msra.mxu0 %v1199
        %1218 = vmatprep.subr.bf16.mxu0 0
        %1219 = vmatpush1.bf16.msra.mxu0 %v1200
        %1220 = vmatprep.subr.bf16.mxu0 0
        %1221 = vmatpush1.bf16.msra.mxu0 %v1201
        %1222 = vmatprep.subr.bf16.mxu0 0
        %1223 = vmatpush1.bf16.msra.mxu0 %v1202
        %1224 = vmatprep.subr.bf16.mxu0 0
        %1225 = vmatpush1.bf16.msra.mxu0 %v1203
        %1226 = vmatprep.subr.bf16.mxu0 0
        %1227 = vmatpush1.bf16.msra.mxu0 %v1204
        %1228 = vmatprep.subr.bf16.mxu0 0
        %1229 = vmatpush1.bf16.msra.mxu0 %v1205
        %1230 = vmatprep.subr.bf16.mxu0 0
        %1231 = vmatpush1.bf16.msra.mxu0 0
        %1232 = vmatprep.subr.bf16.mxu0 0
        %1233 = vmatpush1.bf16.msra.mxu0 0
        %1234 = vmatprep.subr.bf16.mxu0 0
        %1235 = vmatpush1.bf16.msra.mxu0 0
        %1236 = vmatprep.subr.bf16.mxu0 0
        %1237 = vmatpush1.bf16.msra.mxu0 0
        %1238 = vmatprep.subr.bf16.mxu0 0
        %1239 = vmatpush1.bf16.msra.mxu0 0
        %1240 = vmatprep.subr.bf16.mxu0 0
        %1241 = vmatpush1.bf16.msra.mxu0 0
        %1242 = vmatprep.subr.bf16.mxu0 0
        %1243 = vmatpush1.bf16.msra.mxu0 0
        %1244 = vmatprep.subr.bf16.mxu0 0
        %1245 = vmatpush1.bf16.msra.mxu0 0
        %1246 = vmatprep.mubr.bf16.mxu0 0
        %1247 = vmatmul.mubr.bf16.gmra.mrb[0].mxu0 %v1141
        %v1248 = vpop.f32.mrb[0].mxu0
        %v1249 = vadd.f32 %v1164, %v1248
        %v1250 = vpop.f32.mrb[0].mxu0
        %v1251 = vpop.f32.mrb[0].mxu0
        %v1252 = vadd.f32 %v1164, %v1251
        %v1253 = vpop.f32.mrb[0].mxu0
        %1254 = vmatprep.mubr.bf16.mxu0 0
        %1255 = vmatmul.mubr.bf16.gmra.mrb[0].mxu0 %v1142
        %v1256 = vpop.f32.mrb[0].mxu0
        %v1257 = vadd.f32 %v1164, %v1256
        %v1258 = vpop.f32.mrb[0].mxu0
        %v1259 = vpop.f32.mrb[0].mxu0
        %v1260 = vadd.f32 %v1164, %v1259
        %v1261 = vpop.f32.mrb[0].mxu0
        %1262 = vdwg.mxu0
        %1263 = vset.pattern.permute.xlu0 6
        %1264 = vperm.xlu0 %1263, %v311
        %v1265 = vpop.permute.xlu0 %1264
        %1266 = vset.pattern.permute.xlu0 6
        %1267 = vperm.xlu0 %1266, %v312
        %v1268 = vpop.permute.xlu0 %1267
        %1269 = vset.pattern.permute.xlu0 6
        %1270 = vperm.xlu0 %1269, %v313
        %v1271 = vpop.permute.xlu0 %1270
        %1272 = vset.pattern.permute.xlu0 6
        %1273 = vperm.xlu0 %1272, %v314
        %v1274 = vpop.permute.xlu0 %1273
        %vm1275 = vcmp.eq.s32.totalorder %v316, %v1265
        %vm1276 = vcmp.eq.s32.totalorder %v316, %v1268
        %vm1277 = vcmp.eq.s32.totalorder %v316, %v1271
        %vm1278 = vcmp.eq.s32.totalorder %v316, %v1274
        %v1279 = vsel %vm1275, 1, 0
        %v1280 = vsel %vm1276, 1, 0
        %v1281 = vsel %vm1277, 1, 0
        %v1282 = vsel %vm1278, 1, 0
        %v1283 = vcvt.s32.f32 %v1279
        %v1284 = vcvt.s32.f32 %v1280
        %v1285 = vcvt.s32.f32 %v1281
        %v1286 = vcvt.s32.f32 %v1282
        %v1287 = vsub.s32 %v311, 1
        %v1288 = vsub.s32 %v312, 1
        %v1289 = vsub.s32 %v313, 1
        %v1290 = vsub.s32 %v314, 1
        %vm1291 = vcmp.gt.s32.totalorder %v1287, 0
        %v1292 = vsel %vm1291, %v1287, 0
        %vm1293 = vcmp.gt.s32.totalorder %v1288, 0
        %v1294 = vsel %vm1293, %v1288, 0
        %vm1295 = vcmp.gt.s32.totalorder %v1289, 0
        %v1296 = vsel %vm1295, %v1289, 0
        %vm1297 = vcmp.gt.s32.totalorder %v1290, 0
        %v1298 = vsel %vm1297, %v1290, 0
        %v1299 = vadd.s32 %v311, 1
        %v1300 = vadd.s32 %v312, 1
        %v1301 = vadd.s32 %v313, 1
        %v1302 = vadd.s32 %v314, 1
        %vm1303 = vcmp.lt.s32.totalorder %v1299, 6
        %v1304 = vsel %vm1303, %v1299, 6
        %vm1305 = vcmp.lt.s32.totalorder %v1300, 6
        %v1306 = vsel %vm1305, %v1300, 6
        %vm1307 = vcmp.lt.s32.totalorder %v1301, 6
        %v1308 = vsel %vm1307, %v1301, 6
        %vm1309 = vcmp.lt.s32.totalorder %v1302, 6
        %v1310 = vsel %vm1309, %v1302, 6
        %1311 = vset.pattern.permute.xlu0 6
        %1312 = vperm.xlu0 %1311, %v1292
        %v1313 = vpop.permute.xlu0 %1312
        %1314 = vset.pattern.permute.xlu0 6
        %1315 = vperm.xlu0 %1314, %v1294
        %v1316 = vpop.permute.xlu0 %1315
        %1317 = vset.pattern.permute.xlu0 6
        %1318 = vperm.xlu0 %1317, %v1296
        %v1319 = vpop.permute.xlu0 %1318
        %1320 = vset.pattern.permute.xlu0 6
        %1321 = vperm.xlu0 %1320, %v1298
        %v1322 = vpop.permute.xlu0 %1321
        %vm1323 = vcmp.eq.s32.totalorder %v316, %v1313
        %vm1324 = vcmp.eq.s32.totalorder %v316, %v1316
        %vm1325 = vcmp.eq.s32.totalorder %v316, %v1319
        %vm1326 = vcmp.eq.s32.totalorder %v316, %v1322
        %v1327 = vsel %vm1323, 1, 0
        %v1328 = vsel %vm1324, 1, 0
        %v1329 = vsel %vm1325, 1, 0
        %v1330 = vsel %vm1326, 1, 0
        %v1331 = vcvt.s32.f32 %v1327
        %v1332 = vcvt.s32.f32 %v1328
        %v1333 = vcvt.s32.f32 %v1329
        %v1334 = vcvt.s32.f32 %v1330
        %v1335 = vadd.f32 %v1283, %v1331
        %v1336 = vadd.f32 %v1284, %v1332
        %v1337 = vadd.f32 %v1285, %v1333
        %v1338 = vadd.f32 %v1286, %v1334
        %1339 = vset.pattern.permute.xlu0 6
        %1340 = vperm.xlu0 %1339, %v1304
        %v1341 = vpop.permute.xlu0 %1340
        %1342 = vset.pattern.permute.xlu0 6
        %1343 = vperm.xlu0 %1342, %v1306
        %v1344 = vpop.permute.xlu0 %1343
        %1345 = vset.pattern.permute.xlu0 6
        %1346 = vperm.xlu0 %1345, %v1308
        %v1347 = vpop.permute.xlu0 %1346
        %1348 = vset.pattern.permute.xlu0 6
        %1349 = vperm.xlu0 %1348, %v1310
        %v1350 = vpop.permute.xlu0 %1349
        %vm1351 = vcmp.eq.s32.totalorder %v316, %v1341
        %vm1352 = vcmp.eq.s32.totalorder %v316, %v1344
        %vm1353 = vcmp.eq.s32.totalorder %v316, %v1347
        %vm1354 = vcmp.eq.s32.totalorder %v316, %v1350
        %v1355 = vsel %vm1351, 1, 0
        %v1356 = vsel %vm1352, 1, 0
        %v1357 = vsel %vm1353, 1, 0
        %v1358 = vsel %vm1354, 1, 0
        %v1359 = vcvt.s32.f32 %v1355
        %v1360 = vcvt.s32.f32 %v1356
        %v1361 = vcvt.s32.f32 %v1357
        %v1362 = vcvt.s32.f32 %v1358
        %v1363 = vadd.f32 %v1335, %v1359
        %v1364 = vadd.f32 %v1336, %v1360
        %v1365 = vadd.f32 %v1337, %v1361
        %v1366 = vadd.f32 %v1338, %v1362
        %v1367 = vmul.f32 %v1249, %v1363
        %v1368 = vmul.f32 %v1252, %v1364
        %v1369 = vmul.f32 %v1257, %v1365
        %v1370 = vmul.f32 %v1260, %v1366
        %1371 = vadd.xlane.f32.xlu0 %v1367
        %v1372 = vpop.xlane.xlu0 %1371
        %1373 = vadd.xlane.f32.xlu0 %v1368
        %v1374 = vpop.xlane.xlu0 %1373
        %1375 = vadd.xlane.f32.xlu0 %v1369
        %v1376 = vpop.xlane.xlu0 %1375
        %1377 = vadd.xlane.f32.xlu0 %v1370
        %v1378 = vpop.xlane.xlu0 %1377
        %v1379 = vmul.f32 %v1372, 0.33333334
        %v1380 = vmul.f32 %v1374, 0.33333334
        %v1381 = vmul.f32 %v1376, 0.33333334
        %v1382 = vmul.f32 %v1378, 0.33333334
        %v1383 = vxor.u32 %v1379, 2147483648
        %v1384 = vxor.u32 %v1380, 2147483648
        %v1385 = vxor.u32 %v1381, 2147483648
        %v1386 = vxor.u32 %v1382, 2147483648
        %v1387 = vmul.f32 %v1383, 1.442695
        %v1388 = vpow.pop %v1387
        %v1389 = vmul.f32 %v1384, 1.442695
        %v1390 = vpow.pop %v1389
        %v1391 = vmul.f32 %v1385, 1.442695
        %v1392 = vpow.pop %v1391
        %v1393 = vmul.f32 %v1386, 1.442695
        %v1394 = vpow.pop %v1393
        %v1395 = vadd.f32 %v1388, 1.0
        %v1396 = vadd.f32 %v1390, 1.0
        %v1397 = vadd.f32 %v1392, 1.0
        %v1398 = vadd.f32 %v1394, 1.0
        %v1399 = vrcp.pop %v1395
        %v1400 = vmul.f32 1.0, %v1399
        %v1401 = vrcp.pop %v1396
        %v1402 = vmul.f32 1.0, %v1401
        %v1403 = vrcp.pop %v1397
        %v1404 = vmul.f32 1.0, %v1403
        %v1405 = vrcp.pop %v1398
        %v1406 = vmul.f32 1.0, %v1405
        %vm1407 = vcmp.eq.s32.totalorder %v316, 7
        %v1408 = vsel %vm1407, %v1400, %v1249
        %v1409 = vsel %vm1407, %v1402, %v1252
        %v1410 = vsel %vm1407, %v1404, %v1257
        %v1411 = vsel %vm1407, %v1406, %v1260
        %v1412 = vpack.c.bf16 %v1409, %v1408
        %v1413 = vpack.c.bf16 %v1411, %v1410
        %v1416 = vunpack.c.l.b16 %v1412
        %v1417 = vunpack.c.h.b16 %v1412
        %v1418 = vunpack.c.l.b16 %v1413
        %v1419 = vunpack.c.h.b16 %v1413
        %v1420 = vpack.c.b16 %v1416, %v1416
        %v1421 = vpack.c.b16 %v1417, %v1417
        %v1422 = vpack.c.b16 %v1418, %v1418
        %v1423 = vpack.c.b16 %v1419, %v1419
        %1428 = vst [vmem:[%s302] sm:$0xf] %v1420
        %1429 = vst [vmem:[%s302 + $0x4] sm:$0xf] %v1421
        %1430 = vst [vmem:[%s302 + $0x8] sm:$0xf] %v1422
        %1431 = vst [vmem:[%s302 + $0xc] sm:$0xf] %v1423
        %s1432 = sand.u32 %s183, 1
        %s1433 = scalar_lea.sflag [#allocation4], %s1432
        %s1434 = sand.u32 %s183, 1
        %s1435 = smul.addr %s1434, 16
        %s1436 = scalar_lea.vmem [#allocation7], %s1435
        // Predicated region
        $region57: #{tpu_custom_call.1} parent=47 // pred_check
          %p1437 = pneg %p193
        $region58: #{tpu_custom_call.1} parent=47 // pred_check_branch
          %1439 = sbr.rel (%p1437) target = $region60
        $region59: #{tpu_custom_call.1} parent=47 // pred_region
          %s1440 = smul.u32 4, %s23
          %s1442 = ssub.s32 256, 256
          %1443 = vsyncadd %s1433, %s1442
          %s1444 = smul.addr %s1440, 64
          %s1445 = scalar_lea.hbm %s7, %s1444
          %s1446 = sshll.u32 %s1436, 4
          %s1447 = int_to_ptr.vmem [resolvable:$true] %s1446
          %1452 = dma.vmem_to_hbm [thread:$0]  %s1447, 256, %s1445, %s1433, 64, 64, 4
        $region60: #{tpu_custom_call.1} parent=47 // pred_fallthru
          _
      $region48: #{tpu_custom_call.1} parent=5 // pred_fallthru
        _
      %p1453 = scmp.le.s32.totalorder 2, %s18
      // Predicated region
      $region61: #{tpu_custom_call.1} parent=5 // pred_check
        %p1454 = pneg %p1453
      $region62: #{tpu_custom_call.1} parent=5 // pred_check_branch
        %1456 = sbr.rel (%p1454) target = $region64
      $region63: #{tpu_custom_call.1} parent=5 // pred_region
        %s1457 = ssub.s32 %s18, 2
        // Predicated region
        $region65: #{tpu_custom_call.1} parent=63 // pred_check
          %p1458 = pneg %p199
        $region66: #{tpu_custom_call.1} parent=63 // pred_check_branch
          %1460 = sbr.rel (%p1458) target = $region68
        $region67: #{tpu_custom_call.1} parent=63 // pred_region
          %s1461 = sand.u32 %s184, 1
          %s1462 = scalar_lea.sflag [#allocation4], %s1461
          %s1463 = sand.u32 %s184, 1
          %s1464 = smul.addr %s1463, 16
          %s1465 = scalar_lea.vmem [#allocation7], %s1464
          %1466 = dma.done %s1462, 256
        $region68: #{tpu_custom_call.1} parent=63 // pred_fallthru
          _
      $region64: #{tpu_custom_call.1} parent=5 // pred_fallthru
        _
    $region6: #{tpu_custom_call.1} parent=1 // loop_footer
      %s22 = sadd.s32 1, %s18
    $region7: #{tpu_custom_call.1} parent=1 // loop_footer_branch
      %17 = sbr.rel target = $region3
    $region8: #{tpu_custom_call.1} parent=1 // loop_exit
      _
    %1467 = vsyncpa [#allocation3], 1
    %s1468 = scalar_lea.sflag [#allocation3], 1
    %1469 = vsyncpa %s1468, 1
    %1470 = vsyncpa [#allocation6], 1
    %1471 = vsyncpa [#allocation4], 1
    %s1472 = scalar_lea.sflag [#allocation4], 1
    %1473 = vsyncpa %s1472, 1

</llo_original>
